<compile_context>
chip_gen: v6e
topology: v6e:2x2x1
jax: 0.10.0
libtpu: 0.0.40
codegen_flags: <defaults>
</compile_context>

<pallas_src>
import numpy as np
import jax
import jax.numpy as jnp
from jax.experimental import pallas as pl
from jax.experimental.pallas import tpu as pltpu


def _ceil_to(x, m):
    return ((x + m - 1) // m) * m


def _tuckerttr_kernel(re_ref, t_ref, texp_ref, w2_ref, rmat_ref, et_ref,
                      out_ref, x_ref):
    # x (bt, de) depends only on the batch tile, not on the entity tile.  The
    # ne-tile axis j is the inner ("arbitrary") grid axis, so compute x once
    # per batch tile and cache it in VMEM scratch.
    @pl.when(pl.program_id(1) == 0)
    def _():
        # s2[b, k*dt+l] = sum_{i,j} r[b,i] e1[b,j] W[i,j,k,l]       (MXU, bf16)
        s2 = jnp.dot(re_ref[...], w2_ref[...],
                     preferred_element_type=jnp.float32)            # (bt, de*dt)
        # t_rep[b, k*dt+l] = t[b,l]  via tiny 0/1 "expand" matmul   (MXU)
        t_rep = jnp.dot(t_ref[...], texp_ref[...],
                        preferred_element_type=jnp.float32)         # (bt, de*dt)
        # x[b,k] = sum_l s2[b,k*dt+l] * t[b,l] via 0/1 segmented sum (MXU)
        x = jnp.dot(s2 * t_rep, rmat_ref[...],
                    preferred_element_type=jnp.float32)             # (bt, de)
        x_ref[...] = x.astype(x_ref.dtype)

    # Scores for this entity tile + sigmoid (exp on EUP, approx recip on EUP).
    logits = jnp.dot(x_ref[...], et_ref[...],
                     preferred_element_type=jnp.float32)            # (bt, tile_ne)
    out_ref[...] = pl.reciprocal(1.0 + jnp.exp(-logits),
                                 approx=True).astype(out_ref.dtype)


def tuckerttr_forward(e1_idx, r_idx, t_idx, E, R, T, Zlist, *,
                      block_b=128, block_ne=2048,
                      weight_dtype=jnp.bfloat16):
    ne, de = E.shape
    dr = R.shape[1]
    dt = T.shape[1]
    B = e1_idx.shape[0]
    assert block_b % 8 == 0, "batch tile must be a multiple of 8 sublanes"

    # ---- glue (XLA): gathers, TT-ring core reconstruction, tiny constants ----
    e1 = E[e1_idx]                                            # (B, de)
    r = R[r_idx]                                              # (B, dr)
    t = T[t_idx].astype(jnp.float32)                          # (B, dt)
    W = jnp.einsum('aib,bjc,ckd,dla->ijkl', *Zlist)           # (dr, de, de, dt)
    w2 = W.reshape(dr * de, de * dt).astype(weight_dtype)     # fused W
    # fused kron operand: re[b, i*de + j] = r[b, i] * e1[b, j]
    re = (r[:, :, None] * e1[:, None, :]).reshape(B, dr * de).astype(weight_dtype)
    kl = jnp.arange(de * dt)
    # texp[l, k*dt+l'] = (l == l')  -> replicates t across the de folds
    texp = (kl[None, :] % dt == jnp.arange(dt)[:, None]).astype(jnp.float32)
    # rmat[k*dt+l, k'] = (k == k')  -> segmented lane-sum over l
    rmat = (kl[:, None] // dt == jnp.arange(de)[None, :]).astype(jnp.float32)
    et = E.T.astype(weight_dtype)                             # (de, ne)

    # ---- pad batch to a multiple of the batch tile ----
    B_pad = _ceil_to(B, block_b)
    if B_pad != B:
        re = jnp.pad(re, ((0, B_pad - B), (0, 0)))
        t = jnp.pad(t, ((0, B_pad - B), (0, 0)))

    # ---- tile / pad the entity dimension ----
    if ne <= block_ne:
        tile_ne, ne_pad = ne, ne
    else:
        assert block_ne % 128 == 0, "entity tile must be a multiple of 128 lanes"
        tile_ne = block_ne
        ne_pad = _ceil_to(ne, block_ne)
        et = jnp.pad(et, ((0, 0), (0, ne_pad - ne)))

    grid = (B_pad // block_b, ne_pad // tile_ne)

    wbytes = jnp.dtype(weight_dtype).itemsize
    flops = 2 * B_pad * (dr * de * de * dt      # re @ W2
                         + dt * de * dt         # t @ texp
                         + de * dt * de         # (s2*t_rep) @ rmat
                         + de * ne_pad)         # x @ E^T
    bytes_accessed = (B_pad * dr * de * wbytes + B_pad * dt * 4
                      + dt * de * dt * 4 + dr * de * de * dt * wbytes
                      + de * dt * de * 4 + de * ne_pad * wbytes
                      + B_pad * ne_pad * 4)
    cost = pl.CostEstimate(flops=int(flops),
                           transcendentals=int(B_pad * ne_pad),
                           bytes_accessed=int(bytes_accessed))

    out = pl.pallas_call(
        _tuckerttr_kernel,
        out_shape=jax.ShapeDtypeStruct((B_pad, ne_pad), jnp.float32),
        grid_spec=pltpu.PrefetchScalarGridSpec(
            num_scalar_prefetch=0,
            grid=grid,
            in_specs=[
                pl.BlockSpec((block_b, dr * de), lambda i, j: (i, 0)),   # re
                pl.BlockSpec((block_b, dt), lambda i, j: (i, 0)),        # t
                pl.BlockSpec((dt, de * dt), lambda i, j: (0, 0)),        # texp
                pl.BlockSpec((dr * de, de * dt), lambda i, j: (0, 0)),   # W2
                pl.BlockSpec((de * dt, de), lambda i, j: (0, 0)),        # rmat
                pl.BlockSpec((de, tile_ne), lambda i, j: (0, j)),        # E^T
            ],
            out_specs=pl.BlockSpec((block_b, tile_ne), lambda i, j: (i, j)),
            scratch_shapes=[pltpu.VMEM((block_b, de), weight_dtype)],    # cached x
        ),
        compiler_params=pltpu.CompilerParams(
            # batch tiles are independent (megacore-shardable); the ne-tile
            # axis reuses the x scratch, so it must stay sequential per core.
            dimension_semantics=("parallel", "arbitrary"),
            vmem_limit_bytes=48 * 1024 * 1024,
        ),
        cost_estimate=cost,
    )(re, t, texp, w2, rmat, et)

    return out[:B, :ne]


def tuckerttr_reference(e1_idx, r_idx, t_idx, E, R, T, Zlist):
    """Pure-JAX f32 transcription of the torch forward (correctness check)."""
    de = E.shape[1]
    dr = R.shape[1]
    dt = T.shape[1]
    e1 = E[e1_idx]
    r = R[r_idx]
    t = T[t_idx]
    W = jnp.einsum('aib,bjc,ckd,dla->ijkl', *Zlist).reshape(dr, de, de, dt)
    x = e1.reshape(-1, 1, de)
    W_mat = (r @ W.reshape(dr, -1)).reshape(-1, de, de * dt)
    x = jnp.matmul(x, W_mat).reshape(-1, de, dt)
    x = jnp.matmul(x, t[:, :, None]).reshape(-1, de)
    x = x @ E.T
    return jax.nn.sigmoid(x)


if __name__ == "__main__":
    # Small synthetic sizes consistent with the module.  B=200 / ne=200 with
    # 128-wide tiles exercise batch padding, entity tiling + padding, and the
    # pl.when(j==0) scratch-reuse path (grid = (2, 2)).
    ne, nr, nt = 200, 12, 10         # num entities / relations / timestamps
    de, dr, dt = 32, 16, 8           # embedding dims
    ranks = [4, 4, 4, 4, 4]          # TT-ring ranks (r4 == r0)
    B = 200                          # batch

    key = jax.random.PRNGKey(0)
    keys = jax.random.split(key, 10)

    def xavier(k, shape):
        std = float(np.sqrt(2.0 / (shape[0] + shape[1])))
        return std * jax.random.normal(k, shape, dtype=jnp.float32)

    # deterministic parameter init (mirrors __init__ shapes + init())
    E = xavier(keys[0], (ne, de))
    R = xavier(keys[1], (nr, dr))
    T = xavier(keys[2], (nt, dt))
    ni = [dr, de, de, dt]
    Zlist = [jax.random.uniform(keys[3 + i], (ranks[i], ni[i], ranks[i + 1]),
                                minval=-0.1, maxval=0.1, dtype=jnp.float32)
             for i in range(4)]

    e1_idx = jax.random.randint(keys[7], (B,), 0, ne)
    r_idx = jax.random.randint(keys[8], (B,), 0, nr)
    t_idx = jax.random.randint(keys[9], (B,), 0, nt)

    pred = tuckerttr_forward(e1_idx, r_idx, t_idx, E, R, T, Zlist,
                             block_b=128, block_ne=128)
    pred = jax.block_until_ready(pred)

    ref = jax.block_until_ready(
        tuckerttr_reference(e1_idx, r_idx, t_idx, E, R, T, Zlist))

    # bf16 weights + approx reciprocal -> slightly looser tolerance than f32.
    np.testing.assert_allclose(np.asarray(pred), np.asarray(ref),
                               rtol=2e-2, atol=2e-2)
    assert pred.shape == (B, ne) and pred.dtype == jnp.float32
    print("KERNEL_OK")
</pallas_src>

<mosaic_0001>
module attributes {stable_mosaic.version = 11 : i64} {
  func.func @_tuckerttr_kernel(%arg0: i32, %arg1: i32, %arg2: memref<128x512xbf16, #tpu.memory_space<vmem>>, %arg3: memref<128x8xf32, #tpu.memory_space<vmem>>, %arg4: memref<8x256xf32, #tpu.memory_space<vmem>>, %arg5: memref<512x256xbf16, #tpu.memory_space<vmem>>, %arg6: memref<256x32xf32, #tpu.memory_space<vmem>>, %arg7: memref<32x128xbf16, #tpu.memory_space<vmem>>, %arg8: memref<128x128xf32, #tpu.memory_space<vmem>>, %arg9: memref<128x32xbf16, #tpu.memory_space<vmem>>) attributes {dimension_semantics = [#tpu.dimension_semantics<parallel>, #tpu.dimension_semantics<arbitrary>], iteration_bounds = array<i64: 2, 2>, scalar_prefetch = 0 : i64, scratch_operands = 1 : i64, tpu.core_type = #tpu.core_type<tc>, window_params = [{transform_indices = @transform_0, window_bounds = array<i64: 128, 512>}, {transform_indices = @transform_1, window_bounds = array<i64: 128, 8>}, {pipeline_mode = #tpu.pipeline_mode<synchronous>, transform_indices = @transform_2, window_bounds = array<i64: 8, 256>}, {pipeline_mode = #tpu.pipeline_mode<synchronous>, transform_indices = @transform_3, window_bounds = array<i64: 512, 256>}, {pipeline_mode = #tpu.pipeline_mode<synchronous>, transform_indices = @transform_4, window_bounds = array<i64: 256, 32>}, {transform_indices = @transform_5, window_bounds = array<i64: 32, 128>}, {transform_indices = @transform_6, window_bounds = array<i64: 128, 128>}]} {
    %c0_i32 = arith.constant 0 : i32
    %0 = arith.cmpi eq, %arg1, %c0_i32 : i32
    %1 = arith.extui %0 : i1 to i32
    %c0_i32_0 = arith.constant 0 : i32
    %2 = arith.cmpi ne, %1, %c0_i32_0 : i32
    scf.if %2 {
      %c0_8 = arith.constant 0 : index
      %c0_9 = arith.constant 0 : index
      %13 = vector.load %arg2[%c0_8, %c0_9] : memref<128x512xbf16, #tpu.memory_space<vmem>>, vector<128x512xbf16>
      %c0_10 = arith.constant 0 : index
      %c0_11 = arith.constant 0 : index
      %14 = vector.load %arg5[%c0_10, %c0_11] : memref<512x256xbf16, #tpu.memory_space<vmem>>, vector<512x256xbf16>
      %cst_12 = arith.constant dense<0.000000e+00> : vector<128x256xf32>
      %15 = tpu.matmul %13, %14, %cst_12 {dimension_numbers = #tpu.dot_dimension_numbers<[1], [0], [0], [1], [0, 0, 1, 1], [], []>} : vector<128x512xbf16>, vector<512x256xbf16>, vector<128x256xf32> -> vector<128x256xf32>
      %c0_13 = arith.constant 0 : index
      %c0_14 = arith.constant 0 : index
      %16 = vector.load %arg3[%c0_13, %c0_14] : memref<128x8xf32, #tpu.memory_space<vmem>>, vector<128x8xf32>
      %c0_15 = arith.constant 0 : index
      %c0_16 = arith.constant 0 : index
      %17 = vector.load %arg4[%c0_15, %c0_16] : memref<8x256xf32, #tpu.memory_space<vmem>>, vector<8x256xf32>
      %cst_17 = arith.constant dense<0.000000e+00> : vector<128x256xf32>
      %18 = tpu.matmul %16, %17, %cst_17 {dimension_numbers = #tpu.dot_dimension_numbers<[1], [0], [0], [1], [0, 0, 1, 1], [], []>} : vector<128x8xf32>, vector<8x256xf32>, vector<128x256xf32> -> vector<128x256xf32>
      %19 = arith.mulf %15, %18 : vector<128x256xf32>
      %c0_18 = arith.constant 0 : index
      %c0_19 = arith.constant 0 : index
      %20 = vector.load %arg6[%c0_18, %c0_19] : memref<256x32xf32, #tpu.memory_space<vmem>>, vector<256x32xf32>
      %cst_20 = arith.constant dense<0.000000e+00> : vector<128x32xf32>
      %21 = tpu.matmul %19, %20, %cst_20 {dimension_numbers = #tpu.dot_dimension_numbers<[1], [0], [0], [1], [0, 0, 1, 1], [], []>} : vector<128x256xf32>, vector<256x32xf32>, vector<128x32xf32> -> vector<128x32xf32>
      %22 = arith.truncf %21 : vector<128x32xf32> to vector<128x32xbf16>
      %c0_21 = arith.constant 0 : index
      %c0_22 = arith.constant 0 : index
      %23 = vector.load %arg9[%c0_21, %c0_22] : memref<128x32xbf16, #tpu.memory_space<vmem>>, vector<128x32xbf16>
      tpu.vector_store %arg9[%c0_21, %c0_22], %22 {strides = array<i32>} : memref<128x32xbf16, #tpu.memory_space<vmem>>, vector<128x32xbf16>,
    } else {
    }
    %c0 = arith.constant 0 : index
    %c0_1 = arith.constant 0 : index
    %3 = vector.load %arg9[%c0, %c0_1] : memref<128x32xbf16, #tpu.memory_space<vmem>>, vector<128x32xbf16>
    %c0_2 = arith.constant 0 : index
    %c0_3 = arith.constant 0 : index
    %4 = vector.load %arg7[%c0_2, %c0_3] : memref<32x128xbf16, #tpu.memory_space<vmem>>, vector<32x128xbf16>
    %cst = arith.constant dense<0.000000e+00> : vector<128x128xf32>
    %5 = tpu.matmul %3, %4, %cst {dimension_numbers = #tpu.dot_dimension_numbers<[1], [0], [0], [1], [0, 0, 1, 1], [], []>} : vector<128x32xbf16>, vector<32x128xbf16>, vector<128x128xf32> -> vector<128x128xf32>
    %cst_4 = arith.constant 0.000000e+00 : f32
    %6 = vector.broadcast %cst_4 : f32 to vector<128x128xf32>
    %7 = arith.subf %6, %5 : vector<128x128xf32>
    %8 = math.exp %7 : vector<128x128xf32>
    %cst_5 = arith.constant 1.000000e+00 : f32
    %9 = vector.broadcast %cst_5 : f32 to vector<128x128xf32>
    %10 = arith.addf %9, %8 : vector<128x128xf32>
    %11 = tpu.reciprocal %10 {approx = true} : vector<128x128xf32> -> vector<128x128xf32>
    %c0_6 = arith.constant 0 : index
    %c0_7 = arith.constant 0 : index
    %12 = vector.load %arg8[%c0_6, %c0_7] : memref<128x128xf32, #tpu.memory_space<vmem>>, vector<128x128xf32>
    tpu.vector_store %arg8[%c0_6, %c0_7], %11 {strides = array<i32>} : memref<128x128xf32, #tpu.memory_space<vmem>>, vector<128x128xf32>,
    return
  }
  func.func @transform_0(%arg0: i32, %arg1: i32) -> (i32, i32) {
    %c0_i32 = arith.constant 0 : i32
    %c0_i32_0 = arith.constant 0 : i32
    return %arg0, %c0_i32 : i32, i32
  }
  func.func @transform_1(%arg0: i32, %arg1: i32) -> (i32, i32) {
    %c0_i32 = arith.constant 0 : i32
    %c0_i32_0 = arith.constant 0 : i32
    return %arg0, %c0_i32 : i32, i32
  }
  func.func @transform_2(%arg0: i32, %arg1: i32) -> (i32, i32) {
    %c0_i32 = arith.constant 0 : i32
    %c0_i32_0 = arith.constant 0 : i32
    %c0_i32_1 = arith.constant 0 : i32
    return %c0_i32, %c0_i32_0 : i32, i32
  }
  func.func @transform_3(%arg0: i32, %arg1: i32) -> (i32, i32) {
    %c0_i32 = arith.constant 0 : i32
    %c0_i32_0 = arith.constant 0 : i32
    %c0_i32_1 = arith.constant 0 : i32
    return %c0_i32, %c0_i32_0 : i32, i32
  }
  func.func @transform_4(%arg0: i32, %arg1: i32) -> (i32, i32) {
    %c0_i32 = arith.constant 0 : i32
    %c0_i32_0 = arith.constant 0 : i32
    %c0_i32_1 = arith.constant 0 : i32
    return %c0_i32, %c0_i32_0 : i32, i32
  }
  func.func @transform_5(%arg0: i32, %arg1: i32) -> (i32, i32) {
    %c0_i32 = arith.constant 0 : i32
    %c0_i32_0 = arith.constant 0 : i32
    return %c0_i32, %arg1 : i32, i32
  }
  func.func @transform_6(%arg0: i32, %arg1: i32) -> (i32, i32) {
    %c0_i32 = arith.constant 0 : i32
    return %arg0, %arg1 : i32, i32
  }
}

</mosaic_0001>

<llo_original>
// kernel: tpu_custom_call.1
$region0: #{tpu_custom_call.1}
  #allocation0 [shape = 'u32[]', space=smem, size = 0x4, offset = 0x4, fixed_abs, tag = 'smem constant byte address 0x4 - core index']
  #allocation1 [shape = 'u32[144,128]{1,0:T(1,128)}', space=vmem, size = 0x12000, scoped, tag = 'internal scratch']
  #allocation2 [shape = 'bf16[128,32]{1,0:T(8,128)(2,1)}', space=vmem, size = 0x8000, scoped, tag = 'scratch operand']
  %s0 = inlined_call_operand.vmem [shape: bf16[256,512], index: 0, kind: input, shape index: {}]
  %s1 = inlined_call_operand.vmem [shape: f32[256,8], index: 1, kind: input, shape index: {}]
  %s2 = inlined_call_operand.vmem [shape: f32[8,256], index: 2, kind: input, shape index: {}]
  %s3 = inlined_call_operand.hbm [shape: bf16[512,256], index: 3, kind: input, shape index: {}]
  %s4 = inlined_call_operand.vmem [shape: f32[256,32], index: 4, kind: input, shape index: {}]
  %s5 = inlined_call_operand.hbm [shape: bf16[32,256], index: 5, kind: input, shape index: {}]
  %s6 = inlined_call_operand.hbm [shape: f32[256,256], index: 6, kind: output, shape index: {}]
  %s7 = sld [smem:[#allocation0]]
  $region69: #{tpu_custom_call.1} parent=0
    _
  %s9 = ssub.s32 1, %s7
  %s10 = scalar_select 0, %s9, %s7
  $region1: #{tpu_custom_call.1} parent=0
    #allocation3 [shape = 'u8[262144]{0}', space=vmem, size = 0x40000, scoped, tag = 'input window, operand 3, single buffered']
    #allocation4 [shape = 's32[2]{0}', space=sflag, size = 0x8, scoped, tag = 'scoped memory for tpu_custom_call.1']
    #allocation5 [shape = 's32[2]{0}', space=sflag, size = 0x8, scoped, tag = 'scoped memory for tpu_custom_call.1']
    #allocation6 [shape = 'u8[16384]{0}', space=vmem, size = 0x4000, scoped, tag = 'input window, operand 5']
    #allocation7 [shape = 's32[2]{0}', space=sflag, size = 0x8, scoped, tag = 'scoped memory for tpu_custom_call.1']
    #allocation8 [shape = 'u8[131072]{0}', space=vmem, size = 0x20000, scoped, tag = 'output window, operand 0']
    %11 = vsyncpa [#allocation4], 0
    %12 = vsyncpa [#allocation7], 0
    %s13 = scalar_lea.sflag [#allocation7], 1
    %14 = vsyncpa %s13, 0
    %15 = vsyncpa [#allocation5], 0
    %s16 = scalar_lea.sflag [#allocation5], 1
    %17 = vsyncpa %s16, 0
    loop: start=0, step=1, limit=6
    $region2: #{tpu_custom_call.1} parent=1 // loop_pre_header
      _
    $region3: #{tpu_custom_call.1} parent=1 // loop_header
      %s19 = sphi 0, %s23
      %p20 = scmp.ge.s32.totalorder %s19, 6
      %s26 = sphi 0, %s38
      %s27 = sphi 0, %s34
      %s28 = sphi 0, %s26
      %s29 = sphi 0, %s27
      %s30 = sphi 0, %s28
      %s31 = sphi 0, %s29
      %s41 = sphi 0, %s43
      %s44 = sphi 0, %s41
      %s45 = sphi 0, %s44
      %s61 = sphi 0, %s45
      %s67 = sphi 0, %s69
      %s70 = sphi 0, %s67
      %s71 = sphi 0, %s70
      %s87 = sphi 0, %s71
      %s91 = sphi 0, %s91
      %s93 = sphi 0, %s91
      %s94 = sphi 0, %s93
      %s108 = sphi 0, %s94
      %s112 = sphi 0, %s112
      %s114 = sphi 0, %s112
      %s115 = sphi 0, %s114
      %s129 = sphi 0, %s115
      %s133 = sphi 0, %s133
      %s135 = sphi 0, %s133
      %s136 = sphi 0, %s135
      %s150 = sphi 0, %s136
      %s156 = sphi 0, %s158
      %s159 = sphi 0, %s156
      %s160 = sphi 0, %s159
      %s176 = sphi 0, %s160
      %s184 = sphi 0, %s186
      %s187 = sphi 0, %s184
      %s188 = sphi 0, %s187
      %s204 = sphi 0, %s188
    $region4: #{tpu_custom_call.1} parent=1 // loop_header_branch
      %22 = sbr.rel (%p20) target = $region8
    $region5: #{tpu_custom_call.1} parent=1 // loop_body
      %s24 = ssub.s32 %s19, 1
      %s25 = ssub.s32 %s19, 2
      %s32 = sadd.s32 1, %s27
      %p33 = scmp.ge.s32.totalorder %s32, 2
      %s34 = scalar_select %p33, 0, %s32
      %s35 = sadd.s32 1, %s26
      %s36 = scalar_select %p33, %s35, %s26
      %p37 = scmp.ge.s32.totalorder %s36, 2
      %s38 = scalar_select %p37, 0, %s36
      %s39 = ssub.s32 %s26, %s38
      %p40 = scmp.eq.s32.totalorder %s39, 0
      %s42 = sadd.s32 %s41, 1
      %s43 = scalar_select %p40, %s41, %s42
      %p46 = pneg %p40
      %p47 = scmp.eq.s32.totalorder %s19, 3
      %p48 = por %p46, %p47
      %p49 = scmp.ne.s32.totalorder %s41, %s44
      %p50 = scmp.eq.s32.totalorder %s19, 0
      %p51 = por %p49, %p50
      %p52 = scmp.ne.s32.totalorder %s41, %s44
      %p53 = scmp.eq.s32.totalorder %s24, 3
      %p54 = por %p52, %p53
      %p55 = scmp.ne.s32.totalorder %s44, %s45
      %p56 = scmp.eq.s32.totalorder %s24, 0
      %p57 = por %p55, %p56
      %p58 = scmp.ne.s32.totalorder %s44, %s45
      %p59 = scmp.eq.s32.totalorder %s25, 3
      %p60 = por %p58, %p59
      %p62 = scmp.ne.s32.totalorder %s45, %s61
      %p63 = scmp.eq.s32.totalorder %s25, 0
      %p64 = por %p62, %p63
      %s65 = ssub.s32 %s26, %s38
      %p66 = scmp.eq.s32.totalorder %s65, 0
      %s68 = sadd.s32 %s67, 1
      %s69 = scalar_select %p66, %s67, %s68
      %p72 = pneg %p66
      %p73 = scmp.eq.s32.totalorder %s19, 3
      %p74 = por %p72, %p73
      %p75 = scmp.ne.s32.totalorder %s67, %s70
      %p76 = scmp.eq.s32.totalorder %s19, 0
      %p77 = por %p75, %p76
      %p78 = scmp.ne.s32.totalorder %s67, %s70
      %p79 = scmp.eq.s32.totalorder %s24, 3
      %p80 = por %p78, %p79
      %p81 = scmp.ne.s32.totalorder %s70, %s71
      %p82 = scmp.eq.s32.totalorder %s24, 0
      %p83 = por %p81, %p82
      %p84 = scmp.ne.s32.totalorder %s70, %s71
      %p85 = scmp.eq.s32.totalorder %s25, 3
      %p86 = por %p84, %p85
      %p88 = scmp.ne.s32.totalorder %s71, %s87
      %p89 = scmp.eq.s32.totalorder %s25, 0
      %p90 = por %p88, %p89
      %s92 = sadd.s32 %s91, 1
      %p95 = scmp.eq.s32.totalorder %s19, 3
      %p96 = scmp.ne.s32.totalorder %s91, %s93
      %p97 = scmp.eq.s32.totalorder %s19, 0
      %p98 = por %p96, %p97
      %p99 = scmp.ne.s32.totalorder %s91, %s93
      %p100 = scmp.eq.s32.totalorder %s24, 3
      %p101 = por %p99, %p100
      %p102 = scmp.ne.s32.totalorder %s93, %s94
      %p103 = scmp.eq.s32.totalorder %s24, 0
      %p104 = por %p102, %p103
      %p105 = scmp.ne.s32.totalorder %s93, %s94
      %p106 = scmp.eq.s32.totalorder %s25, 3
      %p107 = por %p105, %p106
      %p109 = scmp.ne.s32.totalorder %s94, %s108
      %p110 = scmp.eq.s32.totalorder %s25, 0
      %p111 = por %p109, %p110
      %s113 = sadd.s32 %s112, 1
      %p116 = scmp.eq.s32.totalorder %s19, 3
      %p117 = scmp.ne.s32.totalorder %s112, %s114
      %p118 = scmp.eq.s32.totalorder %s19, 0
      %p119 = por %p117, %p118
      %p120 = scmp.ne.s32.totalorder %s112, %s114
      %p121 = scmp.eq.s32.totalorder %s24, 3
      %p122 = por %p120, %p121
      %p123 = scmp.ne.s32.totalorder %s114, %s115
      %p124 = scmp.eq.s32.totalorder %s24, 0
      %p125 = por %p123, %p124
      %p126 = scmp.ne.s32.totalorder %s114, %s115
      %p127 = scmp.eq.s32.totalorder %s25, 3
      %p128 = por %p126, %p127
      %p130 = scmp.ne.s32.totalorder %s115, %s129
      %p131 = scmp.eq.s32.totalorder %s25, 0
      %p132 = por %p130, %p131
      %s134 = sadd.s32 %s133, 1
      %p137 = scmp.eq.s32.totalorder %s19, 3
      %p138 = scmp.ne.s32.totalorder %s133, %s135
      %p139 = scmp.eq.s32.totalorder %s19, 0
      %p140 = por %p138, %p139
      %p141 = scmp.ne.s32.totalorder %s133, %s135
      %p142 = scmp.eq.s32.totalorder %s24, 3
      %p143 = por %p141, %p142
      %p144 = scmp.ne.s32.totalorder %s135, %s136
      %p145 = scmp.eq.s32.totalorder %s24, 0
      %p146 = por %p144, %p145
      %p147 = scmp.ne.s32.totalorder %s135, %s136
      %p148 = scmp.eq.s32.totalorder %s25, 3
      %p149 = por %p147, %p148
      %p151 = scmp.ne.s32.totalorder %s136, %s150
      %p152 = scmp.eq.s32.totalorder %s25, 0
      %p153 = por %p151, %p152
      %s154 = ssub.s32 %s27, %s34
      %p155 = scmp.eq.s32.totalorder %s154, 0
      %s157 = sadd.s32 %s156, 1
      %s158 = scalar_select %p155, %s156, %s157
      %p161 = pneg %p155
      %p162 = scmp.eq.s32.totalorder %s19, 3
      %p163 = por %p161, %p162
      %p164 = scmp.ne.s32.totalorder %s156, %s159
      %p165 = scmp.eq.s32.totalorder %s19, 0
      %p166 = por %p164, %p165
      %p167 = scmp.ne.s32.totalorder %s156, %s159
      %p168 = scmp.eq.s32.totalorder %s24, 3
      %p169 = por %p167, %p168
      %p170 = scmp.ne.s32.totalorder %s159, %s160
      %p171 = scmp.eq.s32.totalorder %s24, 0
      %p172 = por %p170, %p171
      %p173 = scmp.ne.s32.totalorder %s159, %s160
      %p174 = scmp.eq.s32.totalorder %s25, 3
      %p175 = por %p173, %p174
      %p177 = scmp.ne.s32.totalorder %s160, %s176
      %p178 = scmp.eq.s32.totalorder %s25, 0
      %p179 = por %p177, %p178
      %s180 = ssub.s32 %s26, %s38
      %s181 = ssub.s32 %s27, %s34
      %s182 = sor.u32 %s180, %s181
      %p183 = scmp.eq.s32.totalorder %s182, 0
      %s185 = sadd.s32 %s184, 1
      %s186 = scalar_select %p183, %s184, %s185
      %p189 = pneg %p183
      %p190 = scmp.eq.s32.totalorder %s19, 3
      %p191 = por %p189, %p190
      %p192 = scmp.ne.s32.totalorder %s184, %s187
      %p193 = scmp.eq.s32.totalorder %s19, 0
      %p194 = por %p192, %p193
      %p195 = scmp.ne.s32.totalorder %s184, %s187
      %p196 = scmp.eq.s32.totalorder %s24, 3
      %p197 = por %p195, %p196
      %p198 = scmp.ne.s32.totalorder %s187, %s188
      %p199 = scmp.eq.s32.totalorder %s24, 0
      %p200 = por %p198, %p199
      %p201 = scmp.ne.s32.totalorder %s187, %s188
      %p202 = scmp.eq.s32.totalorder %s25, 3
      %p203 = por %p201, %p202
      %p205 = scmp.ne.s32.totalorder %s188, %s204
      %p206 = scmp.eq.s32.totalorder %s25, 0
      %p207 = por %p205, %p206
      %p208 = scmp.le.s32.totalorder 1, %s19
      %p209 = scmp.lt.s32.totalorder %s19, 5
      %p210 = pnand %p208, %p209
      %p211 = pneg %p210
      // Predicated region
      $region9: #{tpu_custom_call.1} parent=5 // pred_check
        _
      $region10: #{tpu_custom_call.1} parent=5 // pred_check_branch
        %213 = sbr.rel (%p210) target = $region12
      $region11: #{tpu_custom_call.1} parent=5 // pred_region
        %s214 = ssub.s32 %s19, 1
        // Predicated region
        $region13: #{tpu_custom_call.1} parent=11 // pred_check
          %p215 = pneg %p104
        $region14: #{tpu_custom_call.1} parent=11 // pred_check_branch
          %217 = sbr.rel (%p215) target = $region16
        $region15: #{tpu_custom_call.1} parent=11 // pred_region
          _
        $region16: #{tpu_custom_call.1} parent=11 // pred_fallthru
          _
        // Predicated region
        $region17: #{tpu_custom_call.1} parent=11 // pred_check
          %p218 = pneg %p125
        $region18: #{tpu_custom_call.1} parent=11 // pred_check_branch
          %220 = sbr.rel (%p218) target = $region20
        $region19: #{tpu_custom_call.1} parent=11 // pred_region
          %s222 = ssub.s32 8192, 8192
          %223 = vsyncadd [#allocation4], %s222
          %s224 = sshll.u32 [#allocation3], 4
          %s225 = int_to_ptr.vmem [resolvable:$true] %s224
          %230 = dma.hbm_to_vmem [thread:$0]  %s3, 8192, %s225, [#allocation4], 128, 128, 8
        $region20: #{tpu_custom_call.1} parent=11 // pred_fallthru
          _
        // Predicated region
        $region21: #{tpu_custom_call.1} parent=11 // pred_check
          %p231 = pneg %p146
        $region22: #{tpu_custom_call.1} parent=11 // pred_check_branch
          %233 = sbr.rel (%p231) target = $region24
        $region23: #{tpu_custom_call.1} parent=11 // pred_region
          _
        $region24: #{tpu_custom_call.1} parent=11 // pred_fallthru
          _
      $region12: #{tpu_custom_call.1} parent=5 // pred_fallthru
        _
      %p234 = scmp.lt.s32.totalorder %s19, 4
      // Predicated region
      $region25: #{tpu_custom_call.1} parent=5 // pred_check
        %p235 = pneg %p234
      $region26: #{tpu_custom_call.1} parent=5 // pred_check_branch
        %237 = sbr.rel (%p235) target = $region28
      $region27: #{tpu_custom_call.1} parent=5 // pred_region
        // Predicated region
        $region29: #{tpu_custom_call.1} parent=27 // pred_check
          %p238 = pneg %p51
        $region30: #{tpu_custom_call.1} parent=27 // pred_check_branch
          %240 = sbr.rel (%p238) target = $region32
        $region31: #{tpu_custom_call.1} parent=27 // pred_region
          %s241 = smul.u32 16, %s26
          %p242 = scmp.lt.s32.totalorder %s241, 31
          %s243 = scalar_select %p242, %s241, 31
          %s244 = smul.addr %s243, 4
          %s245 = smul.addr %s244, 4
          %s246 = scalar_lea.vmem %s0, %s245
          %s247 = smul.u32 16, %s26
        $region32: #{tpu_custom_call.1} parent=27 // pred_fallthru
          _
        // Predicated region
        $region33: #{tpu_custom_call.1} parent=27 // pred_check
          %p248 = pneg %p77
        $region34: #{tpu_custom_call.1} parent=27 // pred_check_branch
          %250 = sbr.rel (%p248) target = $region36
        $region35: #{tpu_custom_call.1} parent=27 // pred_region
          %s251 = smul.u32 16, %s26
          %p252 = scmp.lt.s32.totalorder %s251, 31
          %s253 = scalar_select %p252, %s251, 31
          %s254 = smul.addr %s253, 8
          %s255 = scalar_lea.vmem %s1, %s254
          %s256 = smul.u32 16, %s26
        $region36: #{tpu_custom_call.1} parent=27 // pred_fallthru
          _
        // Predicated region
        $region37: #{tpu_custom_call.1} parent=27 // pred_check
          %p257 = pneg %p166
        $region38: #{tpu_custom_call.1} parent=27 // pred_check_branch
          %259 = sbr.rel (%p257) target = $region40
        $region39: #{tpu_custom_call.1} parent=27 // pred_region
          %s260 = sand.u32 %s156, 1
          %s261 = scalar_lea.sflag [#allocation7], %s260
          %s262 = sand.u32 %s156, 1
          %s263 = smul.addr %s262, 16
          %s264 = scalar_lea.vmem [#allocation6], %s263
          %s266 = ssub.s32 256, 256
          %267 = vsyncadd %s261, %s266
          %s268 = smul.addr %s27, 64
          %s269 = scalar_lea.hbm %s5, %s268
          %s270 = sshll.u32 %s264, 4
          %s271 = int_to_ptr.vmem [resolvable:$true] %s270
          %276 = dma.hbm_to_vmem [thread:$0]  %s269, 256, %s271, %s261, 128, 64, 4
        $region40: #{tpu_custom_call.1} parent=27 // pred_fallthru
          _
      $region28: #{tpu_custom_call.1} parent=5 // pred_fallthru
        _
      %p277 = scmp.le.s32.totalorder 1, %s19
      %p278 = scmp.lt.s32.totalorder %s19, 5
      %p279 = pnand %p277, %p278
      %p280 = pneg %p279
      // Predicated region
      $region41: #{tpu_custom_call.1} parent=5 // pred_check
        _
      $region42: #{tpu_custom_call.1} parent=5 // pred_check_branch
        %282 = sbr.rel (%p279) target = $region44
      $region43: #{tpu_custom_call.1} parent=5 // pred_region
        %s283 = ssub.s32 %s19, 1
        // Predicated region
        $region45: #{tpu_custom_call.1} parent=43 // pred_check
          %p284 = pneg %p125
        $region46: #{tpu_custom_call.1} parent=43 // pred_check_branch
          %286 = sbr.rel (%p284) target = $region48
        $region47: #{tpu_custom_call.1} parent=43 // pred_region
          %287 = dma.done [#allocation4], 8192
        $region48: #{tpu_custom_call.1} parent=43 // pred_fallthru
          _
        %s288 = sand.u32 %s159, 1
        %s289 = scalar_lea.sflag [#allocation7], %s288
        %s290 = sand.u32 %s159, 1
        %s291 = smul.addr %s290, 16
        %s292 = scalar_lea.vmem [#allocation6], %s291
        // Predicated region
        $region49: #{tpu_custom_call.1} parent=43 // pred_check
          %p293 = pneg %p172
        $region50: #{tpu_custom_call.1} parent=43 // pred_check_branch
          %295 = sbr.rel (%p293) target = $region52
        $region51: #{tpu_custom_call.1} parent=43 // pred_region
          %296 = dma.done %s289, 256
        $region52: #{tpu_custom_call.1} parent=43 // pred_fallthru
          _
        %s297 = smul.u32 16, %s28
        %p298 = scmp.lt.s32.totalorder %s297, 31
        %s299 = scalar_select %p298, %s297, 31
        %s300 = smul.addr %s299, 4
        %s301 = smul.addr %s300, 4
        %s302 = scalar_lea.vmem %s0, %s301
        %p303 = pneg %p57
        %p304 = pneg %p54
        %s305 = smul.u32 16, %s28
        %p306 = scmp.lt.s32.totalorder %s305, 31
        %s307 = scalar_select %p306, %s305, 31
        %s308 = smul.addr %s307, 8
        %s309 = scalar_lea.vmem %s1, %s308
        %p310 = pneg %p83
        %p311 = pneg %p80
        %p312 = pneg %p104
        %p313 = pneg %p101
        %p314 = pneg %p125
        %p315 = pneg %p122
        %p316 = pneg %p146
        %p317 = pneg %p143
        %s318 = sand.u32 %s159, 1
        %s319 = scalar_lea.sflag [#allocation7], %s318
        %s320 = sand.u32 %s159, 1
        %s321 = smul.addr %s320, 16
        %s322 = scalar_lea.vmem [#allocation6], %s321
        %p323 = pneg %p172
        %p324 = pneg %p169
        %p325 = pneg %p200
        %p326 = pneg %p197
        %s327 = sand.u32 %s187, 1
        %s328 = scalar_lea.sflag [#allocation5], %s327
        %s329 = sand.u32 %s187, 1
        %s330 = smul.addr %s329, 128
        %s331 = scalar_lea.vmem [#allocation8], %s330
        %s332 = smul.u32 16, %s28
        %p333 = scmp.lt.s32.totalorder %s332, 31
        %s334 = scalar_select %p333, %s332, 31
        %s335 = smul.addr %s334, 4
        %s336 = smul.addr %s335, 4
        %s337 = scalar_lea.vmem %s0, %s336
        %s338 = smul.u32 16, %s28
        %s339 = smul.u32 16, %s28
        %p340 = scmp.lt.s32.totalorder %s339, 31
        %s341 = scalar_select %p340, %s339, 31
        %s342 = smul.addr %s341, 8
        %s343 = scalar_lea.vmem %s1, %s342
        %s344 = smul.u32 16, %s28
        %s345 = smul.u32 16, %s28
        %p347 = scmp.eq.s32.totalorder %s29, 0
        // Predicated region
        $region53: #{tpu_custom_call.1} parent=43 // pred_check
          %p348 = pneg %p347
        $region54: #{tpu_custom_call.1} parent=43 // pred_check_branch
          %350 = sbr.rel (%p348) target = $region56
        $region55: #{tpu_custom_call.1} parent=43 // pred_region
          %v351 = vld [vmem:[%s337] sm:$0xff]
          %v352 = vld [vmem:[%s337 + $0x8] sm:$0xff]
          %v353 = vld [vmem:[%s337 + $0x10] sm:$0xff]
          %v354 = vld [vmem:[%s337 + $0x18] sm:$0xff]
          %v355 = vld [vmem:[%s337 + $0x20] sm:$0xff]
          %v356 = vld [vmem:[%s337 + $0x28] sm:$0xff]
          %v357 = vld [vmem:[%s337 + $0x30] sm:$0xff]
          %v358 = vld [vmem:[%s337 + $0x38] sm:$0xff]
          %v359 = vld [vmem:[%s337 + $0x40] sm:$0xff]
          %v360 = vld [vmem:[%s337 + $0x48] sm:$0xff]
          %v361 = vld [vmem:[%s337 + $0x50] sm:$0xff]
          %v362 = vld [vmem:[%s337 + $0x58] sm:$0xff]
          %v363 = vld [vmem:[%s337 + $0x60] sm:$0xff]
          %v364 = vld [vmem:[%s337 + $0x68] sm:$0xff]
          %v365 = vld [vmem:[%s337 + $0x70] sm:$0xff]
          %v366 = vld [vmem:[%s337 + $0x78] sm:$0xff]
          %v367 = vld [vmem:[%s337 + $0x80] sm:$0xff]
          %v368 = vld [vmem:[%s337 + $0x88] sm:$0xff]
          %v369 = vld [vmem:[%s337 + $0x90] sm:$0xff]
          %v370 = vld [vmem:[%s337 + $0x98] sm:$0xff]
          %v371 = vld [vmem:[%s337 + $0xa0] sm:$0xff]
          %v372 = vld [vmem:[%s337 + $0xa8] sm:$0xff]
          %v373 = vld [vmem:[%s337 + $0xb0] sm:$0xff]
          %v374 = vld [vmem:[%s337 + $0xb8] sm:$0xff]
          %v375 = vld [vmem:[%s337 + $0xc0] sm:$0xff]
          %v376 = vld [vmem:[%s337 + $0xc8] sm:$0xff]
          %v377 = vld [vmem:[%s337 + $0xd0] sm:$0xff]
          %v378 = vld [vmem:[%s337 + $0xd8] sm:$0xff]
          %v379 = vld [vmem:[%s337 + $0xe0] sm:$0xff]
          %v380 = vld [vmem:[%s337 + $0xe8] sm:$0xff]
          %v381 = vld [vmem:[%s337 + $0xf0] sm:$0xff]
          %v382 = vld [vmem:[%s337 + $0xf8] sm:$0xff]
          %v383 = vld [vmem:[#allocation3] sm:$0xff]
          %v384 = vld [vmem:[#allocation3 + $0x8] sm:$0xff]
          %v385 = vld [vmem:[#allocation3 + $0x10] sm:$0xff]
          %v386 = vld [vmem:[#allocation3 + $0x18] sm:$0xff]
          %v387 = vld [vmem:[#allocation3 + $0x20] sm:$0xff]
          %v388 = vld [vmem:[#allocation3 + $0x28] sm:$0xff]
          %v389 = vld [vmem:[#allocation3 + $0x30] sm:$0xff]
          %v390 = vld [vmem:[#allocation3 + $0x38] sm:$0xff]
          %v391 = vld [vmem:[#allocation3 + $0x40] sm:$0xff]
          %v392 = vld [vmem:[#allocation3 + $0x48] sm:$0xff]
          %v393 = vld [vmem:[#allocation3 + $0x50] sm:$0xff]
          %v394 = vld [vmem:[#allocation3 + $0x58] sm:$0xff]
          %v395 = vld [vmem:[#allocation3 + $0x60] sm:$0xff]
          %v396 = vld [vmem:[#allocation3 + $0x68] sm:$0xff]
          %v397 = vld [vmem:[#allocation3 + $0x70] sm:$0xff]
          %v398 = vld [vmem:[#allocation3 + $0x78] sm:$0xff]
          %v399 = vld [vmem:[#allocation3 + $0x80] sm:$0xff]
          %v400 = vld [vmem:[#allocation3 + $0x88] sm:$0xff]
          %v401 = vld [vmem:[#allocation3 + $0x90] sm:$0xff]
          %v402 = vld [vmem:[#allocation3 + $0x98] sm:$0xff]
          %v403 = vld [vmem:[#allocation3 + $0xa0] sm:$0xff]
          %v404 = vld [vmem:[#allocation3 + $0xa8] sm:$0xff]
          %v405 = vld [vmem:[#allocation3 + $0xb0] sm:$0xff]
          %v406 = vld [vmem:[#allocation3 + $0xb8] sm:$0xff]
          %v407 = vld [vmem:[#allocation3 + $0xc0] sm:$0xff]
          %v408 = vld [vmem:[#allocation3 + $0xc8] sm:$0xff]
          %v409 = vld [vmem:[#allocation3 + $0xd0] sm:$0xff]
          %v410 = vld [vmem:[#allocation3 + $0xd8] sm:$0xff]
          %v411 = vld [vmem:[#allocation3 + $0xe0] sm:$0xff]
          %v412 = vld [vmem:[#allocation3 + $0xe8] sm:$0xff]
          %v413 = vld [vmem:[#allocation3 + $0xf0] sm:$0xff]
          %v414 = vld [vmem:[#allocation3 + $0xf8] sm:$0xff]
          %v415 = vld [vmem:[#allocation3 + $0x100] sm:$0xff]
          %v416 = vld [vmem:[#allocation3 + $0x108] sm:$0xff]
          %v417 = vld [vmem:[#allocation3 + $0x110] sm:$0xff]
          %v418 = vld [vmem:[#allocation3 + $0x118] sm:$0xff]
          %v419 = vld [vmem:[#allocation3 + $0x120] sm:$0xff]
          %v420 = vld [vmem:[#allocation3 + $0x128] sm:$0xff]
          %v421 = vld [vmem:[#allocation3 + $0x130] sm:$0xff]
          %v422 = vld [vmem:[#allocation3 + $0x138] sm:$0xff]
          %v423 = vld [vmem:[#allocation3 + $0x140] sm:$0xff]
          %v424 = vld [vmem:[#allocation3 + $0x148] sm:$0xff]
          %v425 = vld [vmem:[#allocation3 + $0x150] sm:$0xff]
          %v426 = vld [vmem:[#allocation3 + $0x158] sm:$0xff]
          %v427 = vld [vmem:[#allocation3 + $0x160] sm:$0xff]
          %v428 = vld [vmem:[#allocation3 + $0x168] sm:$0xff]
          %v429 = vld [vmem:[#allocation3 + $0x170] sm:$0xff]
          %v430 = vld [vmem:[#allocation3 + $0x178] sm:$0xff]
          %v431 = vld [vmem:[#allocation3 + $0x180] sm:$0xff]
          %v432 = vld [vmem:[#allocation3 + $0x188] sm:$0xff]
          %v433 = vld [vmem:[#allocation3 + $0x190] sm:$0xff]
          %v434 = vld [vmem:[#allocation3 + $0x198] sm:$0xff]
          %v435 = vld [vmem:[#allocation3 + $0x1a0] sm:$0xff]
          %v436 = vld [vmem:[#allocation3 + $0x1a8] sm:$0xff]
          %v437 = vld [vmem:[#allocation3 + $0x1b0] sm:$0xff]
          %v438 = vld [vmem:[#allocation3 + $0x1b8] sm:$0xff]
          %v439 = vld [vmem:[#allocation3 + $0x1c0] sm:$0xff]
          %v440 = vld [vmem:[#allocation3 + $0x1c8] sm:$0xff]
          %v441 = vld [vmem:[#allocation3 + $0x1d0] sm:$0xff]
          %v442 = vld [vmem:[#allocation3 + $0x1d8] sm:$0xff]
          %v443 = vld [vmem:[#allocation3 + $0x1e0] sm:$0xff]
          %v444 = vld [vmem:[#allocation3 + $0x1e8] sm:$0xff]
          %v445 = vld [vmem:[#allocation3 + $0x1f0] sm:$0xff]
          %v446 = vld [vmem:[#allocation3 + $0x1f8] sm:$0xff]
          %v479 = vunpack.c.l.b16 %v351
          %v480 = vunpack.c.h.b16 %v351
          %v481 = vunpack.c.l.b16 %v352
          %v482 = vunpack.c.h.b16 %v352
          %v483 = vunpack.c.l.b16 %v353
          %v484 = vunpack.c.h.b16 %v353
          %v485 = vunpack.c.l.b16 %v354
          %v486 = vunpack.c.h.b16 %v354
          %v487 = vunpack.c.l.b16 %v355
          %v488 = vunpack.c.h.b16 %v355
          %v489 = vunpack.c.l.b16 %v356
          %v490 = vunpack.c.h.b16 %v356
          %v491 = vunpack.c.l.b16 %v357
          %v492 = vunpack.c.h.b16 %v357
          %v493 = vunpack.c.l.b16 %v358
          %v494 = vunpack.c.h.b16 %v358
          %v495 = vunpack.c.l.b16 %v359
          %v496 = vunpack.c.h.b16 %v359
          %v497 = vunpack.c.l.b16 %v360
          %v498 = vunpack.c.h.b16 %v360
          %v499 = vunpack.c.l.b16 %v361
          %v500 = vunpack.c.h.b16 %v361
          %v501 = vunpack.c.l.b16 %v362
          %v502 = vunpack.c.h.b16 %v362
          %v503 = vunpack.c.l.b16 %v363
          %v504 = vunpack.c.h.b16 %v363
          %v505 = vunpack.c.l.b16 %v364
          %v506 = vunpack.c.h.b16 %v364
          %v507 = vunpack.c.l.b16 %v365
          %v508 = vunpack.c.h.b16 %v365
          %v509 = vunpack.c.l.b16 %v366
          %v510 = vunpack.c.h.b16 %v366
          %v511 = vunpack.c.l.b16 %v367
          %v512 = vunpack.c.h.b16 %v367
          %v513 = vunpack.c.l.b16 %v368
          %v514 = vunpack.c.h.b16 %v368
          %v515 = vunpack.c.l.b16 %v369
          %v516 = vunpack.c.h.b16 %v369
          %v517 = vunpack.c.l.b16 %v370
          %v518 = vunpack.c.h.b16 %v370
          %v519 = vunpack.c.l.b16 %v371
          %v520 = vunpack.c.h.b16 %v371
          %v521 = vunpack.c.l.b16 %v372
          %v522 = vunpack.c.h.b16 %v372
          %v523 = vunpack.c.l.b16 %v373
          %v524 = vunpack.c.h.b16 %v373
          %v525 = vunpack.c.l.b16 %v374
          %v526 = vunpack.c.h.b16 %v374
          %v527 = vunpack.c.l.b16 %v375
          %v528 = vunpack.c.h.b16 %v375
          %v529 = vunpack.c.l.b16 %v376
          %v530 = vunpack.c.h.b16 %v376
          %v531 = vunpack.c.l.b16 %v377
          %v532 = vunpack.c.h.b16 %v377
          %v533 = vunpack.c.l.b16 %v378
          %v534 = vunpack.c.h.b16 %v378
          %v535 = vunpack.c.l.b16 %v379
          %v536 = vunpack.c.h.b16 %v379
          %v537 = vunpack.c.l.b16 %v380
          %v538 = vunpack.c.h.b16 %v380
          %v539 = vunpack.c.l.b16 %v381
          %v540 = vunpack.c.h.b16 %v381
          %v541 = vunpack.c.l.b16 %v382
          %v542 = vunpack.c.h.b16 %v382
          %v543 = vpack.c.b16 %v483, %v479
          %v544 = vpack.c.b16 %v484, %v480
          %v545 = vpack.c.b16 %v485, %v481
          %v546 = vpack.c.b16 %v486, %v482
          %v547 = vpack.c.b16 %v491, %v487
          %v548 = vpack.c.b16 %v492, %v488
          %v549 = vpack.c.b16 %v493, %v489
          %v550 = vpack.c.b16 %v494, %v490
          %v551 = vpack.c.b16 %v499, %v495
          %v552 = vpack.c.b16 %v500, %v496
          %v553 = vpack.c.b16 %v501, %v497
          %v554 = vpack.c.b16 %v502, %v498
          %v555 = vpack.c.b16 %v507, %v503
          %v556 = vpack.c.b16 %v508, %v504
          %v557 = vpack.c.b16 %v509, %v505
          %v558 = vpack.c.b16 %v510, %v506
          %v559 = vpack.c.b16 %v515, %v511
          %v560 = vpack.c.b16 %v516, %v512
          %v561 = vpack.c.b16 %v517, %v513
          %v562 = vpack.c.b16 %v518, %v514
          %v563 = vpack.c.b16 %v523, %v519
          %v564 = vpack.c.b16 %v524, %v520
          %v565 = vpack.c.b16 %v525, %v521
          %v566 = vpack.c.b16 %v526, %v522
          %v567 = vpack.c.b16 %v531, %v527
          %v568 = vpack.c.b16 %v532, %v528
          %v569 = vpack.c.b16 %v533, %v529
          %v570 = vpack.c.b16 %v534, %v530
          %v571 = vpack.c.b16 %v539, %v535
          %v572 = vpack.c.b16 %v540, %v536
          %v573 = vpack.c.b16 %v541, %v537
          %v574 = vpack.c.b16 %v542, %v538
          %v671 = vunpack.c.l.b16 %v383
          %v672 = vunpack.c.h.b16 %v383
          %v673 = vunpack.c.l.b16 %v384
          %v674 = vunpack.c.h.b16 %v384
          %v675 = vunpack.c.l.b16 %v385
          %v676 = vunpack.c.h.b16 %v385
          %v677 = vunpack.c.l.b16 %v386
          %v678 = vunpack.c.h.b16 %v386
          %v679 = vunpack.c.l.b16 %v387
          %v680 = vunpack.c.h.b16 %v387
          %v681 = vunpack.c.l.b16 %v388
          %v682 = vunpack.c.h.b16 %v388
          %v683 = vunpack.c.l.b16 %v389
          %v684 = vunpack.c.h.b16 %v389
          %v685 = vunpack.c.l.b16 %v390
          %v686 = vunpack.c.h.b16 %v390
          %v687 = vunpack.c.l.b16 %v391
          %v688 = vunpack.c.h.b16 %v391
          %v689 = vunpack.c.l.b16 %v392
          %v690 = vunpack.c.h.b16 %v392
          %v691 = vunpack.c.l.b16 %v393
          %v692 = vunpack.c.h.b16 %v393
          %v693 = vunpack.c.l.b16 %v394
          %v694 = vunpack.c.h.b16 %v394
          %v695 = vunpack.c.l.b16 %v395
          %v696 = vunpack.c.h.b16 %v395
          %v697 = vunpack.c.l.b16 %v396
          %v698 = vunpack.c.h.b16 %v396
          %v699 = vunpack.c.l.b16 %v397
          %v700 = vunpack.c.h.b16 %v397
          %v701 = vunpack.c.l.b16 %v398
          %v702 = vunpack.c.h.b16 %v398
          %v703 = vunpack.c.l.b16 %v399
          %v704 = vunpack.c.h.b16 %v399
          %v705 = vunpack.c.l.b16 %v400
          %v706 = vunpack.c.h.b16 %v400
          %v707 = vunpack.c.l.b16 %v401
          %v708 = vunpack.c.h.b16 %v401
          %v709 = vunpack.c.l.b16 %v402
          %v710 = vunpack.c.h.b16 %v402
          %v711 = vunpack.c.l.b16 %v403
          %v712 = vunpack.c.h.b16 %v403
          %v713 = vunpack.c.l.b16 %v404
          %v714 = vunpack.c.h.b16 %v404
          %v715 = vunpack.c.l.b16 %v405
          %v716 = vunpack.c.h.b16 %v405
          %v717 = vunpack.c.l.b16 %v406
          %v718 = vunpack.c.h.b16 %v406
          %v719 = vunpack.c.l.b16 %v407
          %v720 = vunpack.c.h.b16 %v407
          %v721 = vunpack.c.l.b16 %v408
          %v722 = vunpack.c.h.b16 %v408
          %v723 = vunpack.c.l.b16 %v409
          %v724 = vunpack.c.h.b16 %v409
          %v725 = vunpack.c.l.b16 %v410
          %v726 = vunpack.c.h.b16 %v410
          %v727 = vunpack.c.l.b16 %v411
          %v728 = vunpack.c.h.b16 %v411
          %v729 = vunpack.c.l.b16 %v412
          %v730 = vunpack.c.h.b16 %v412
          %v731 = vunpack.c.l.b16 %v413
          %v732 = vunpack.c.h.b16 %v413
          %v733 = vunpack.c.l.b16 %v414
          %v734 = vunpack.c.h.b16 %v414
          %v735 = vunpack.c.l.b16 %v415
          %v736 = vunpack.c.h.b16 %v415
          %v737 = vunpack.c.l.b16 %v416
          %v738 = vunpack.c.h.b16 %v416
          %v739 = vunpack.c.l.b16 %v417
          %v740 = vunpack.c.h.b16 %v417
          %v741 = vunpack.c.l.b16 %v418
          %v742 = vunpack.c.h.b16 %v418
          %v743 = vunpack.c.l.b16 %v419
          %v744 = vunpack.c.h.b16 %v419
          %v745 = vunpack.c.l.b16 %v420
          %v746 = vunpack.c.h.b16 %v420
          %v747 = vunpack.c.l.b16 %v421
          %v748 = vunpack.c.h.b16 %v421
          %v749 = vunpack.c.l.b16 %v422
          %v750 = vunpack.c.h.b16 %v422
          %v751 = vunpack.c.l.b16 %v423
          %v752 = vunpack.c.h.b16 %v423
          %v753 = vunpack.c.l.b16 %v424
          %v754 = vunpack.c.h.b16 %v424
          %v755 = vunpack.c.l.b16 %v425
          %v756 = vunpack.c.h.b16 %v425
          %v757 = vunpack.c.l.b16 %v426
          %v758 = vunpack.c.h.b16 %v426
          %v759 = vunpack.c.l.b16 %v427
          %v760 = vunpack.c.h.b16 %v427
          %v761 = vunpack.c.l.b16 %v428
          %v762 = vunpack.c.h.b16 %v428
          %v763 = vunpack.c.l.b16 %v429
          %v764 = vunpack.c.h.b16 %v429
          %v765 = vunpack.c.l.b16 %v430
          %v766 = vunpack.c.h.b16 %v430
          %v767 = vunpack.c.l.b16 %v431
          %v768 = vunpack.c.h.b16 %v431
          %v769 = vunpack.c.l.b16 %v432
          %v770 = vunpack.c.h.b16 %v432
          %v771 = vunpack.c.l.b16 %v433
          %v772 = vunpack.c.h.b16 %v433
          %v773 = vunpack.c.l.b16 %v434
          %v774 = vunpack.c.h.b16 %v434
          %v775 = vunpack.c.l.b16 %v435
          %v776 = vunpack.c.h.b16 %v435
          %v777 = vunpack.c.l.b16 %v436
          %v778 = vunpack.c.h.b16 %v436
          %v779 = vunpack.c.l.b16 %v437
          %v780 = vunpack.c.h.b16 %v437
          %v781 = vunpack.c.l.b16 %v438
          %v782 = vunpack.c.h.b16 %v438
          %v783 = vunpack.c.l.b16 %v439
          %v784 = vunpack.c.h.b16 %v439
          %v785 = vunpack.c.l.b16 %v440
          %v786 = vunpack.c.h.b16 %v440
          %v787 = vunpack.c.l.b16 %v441
          %v788 = vunpack.c.h.b16 %v441
          %v789 = vunpack.c.l.b16 %v442
          %v790 = vunpack.c.h.b16 %v442
          %v791 = vunpack.c.l.b16 %v443
          %v792 = vunpack.c.h.b16 %v443
          %v793 = vunpack.c.l.b16 %v444
          %v794 = vunpack.c.h.b16 %v444
          %v795 = vunpack.c.l.b16 %v445
          %v796 = vunpack.c.h.b16 %v445
          %v797 = vunpack.c.l.b16 %v446
          %v798 = vunpack.c.h.b16 %v446
          %v799 = vpack.c.b16 %v673, %v671
          %v800 = vpack.c.b16 %v674, %v672
          %v801 = vpack.c.b16 %v677, %v675
          %v802 = vpack.c.b16 %v678, %v676
          %v803 = vpack.c.b16 %v681, %v679
          %v804 = vpack.c.b16 %v682, %v680
          %v805 = vpack.c.b16 %v685, %v683
          %v806 = vpack.c.b16 %v686, %v684
          %v807 = vpack.c.b16 %v689, %v687
          %v808 = vpack.c.b16 %v690, %v688
          %v809 = vpack.c.b16 %v693, %v691
          %v810 = vpack.c.b16 %v694, %v692
          %v811 = vpack.c.b16 %v697, %v695
          %v812 = vpack.c.b16 %v698, %v696
          %v813 = vpack.c.b16 %v701, %v699
          %v814 = vpack.c.b16 %v702, %v700
          %v815 = vpack.c.b16 %v705, %v703
          %v816 = vpack.c.b16 %v706, %v704
          %v817 = vpack.c.b16 %v709, %v707
          %v818 = vpack.c.b16 %v710, %v708
          %v819 = vpack.c.b16 %v713, %v711
          %v820 = vpack.c.b16 %v714, %v712
          %v821 = vpack.c.b16 %v717, %v715
          %v822 = vpack.c.b16 %v718, %v716
          %v823 = vpack.c.b16 %v721, %v719
          %v824 = vpack.c.b16 %v722, %v720
          %v825 = vpack.c.b16 %v725, %v723
          %v826 = vpack.c.b16 %v726, %v724
          %v827 = vpack.c.b16 %v729, %v727
          %v828 = vpack.c.b16 %v730, %v728
          %v829 = vpack.c.b16 %v733, %v731
          %v830 = vpack.c.b16 %v734, %v732
          %v831 = vpack.c.b16 %v737, %v735
          %v832 = vpack.c.b16 %v738, %v736
          %v833 = vpack.c.b16 %v741, %v739
          %v834 = vpack.c.b16 %v742, %v740
          %v835 = vpack.c.b16 %v745, %v743
          %v836 = vpack.c.b16 %v746, %v744
          %v837 = vpack.c.b16 %v749, %v747
          %v838 = vpack.c.b16 %v750, %v748
          %v839 = vpack.c.b16 %v753, %v751
          %v840 = vpack.c.b16 %v754, %v752
          %v841 = vpack.c.b16 %v757, %v755
          %v842 = vpack.c.b16 %v758, %v756
          %v843 = vpack.c.b16 %v761, %v759
          %v844 = vpack.c.b16 %v762, %v760
          %v845 = vpack.c.b16 %v765, %v763
          %v846 = vpack.c.b16 %v766, %v764
          %v847 = vpack.c.b16 %v769, %v767
          %v848 = vpack.c.b16 %v770, %v768
          %v849 = vpack.c.b16 %v773, %v771
          %v850 = vpack.c.b16 %v774, %v772
          %v851 = vpack.c.b16 %v777, %v775
          %v852 = vpack.c.b16 %v778, %v776
          %v853 = vpack.c.b16 %v781, %v779
          %v854 = vpack.c.b16 %v782, %v780
          %v855 = vpack.c.b16 %v785, %v783
          %v856 = vpack.c.b16 %v786, %v784
          %v857 = vpack.c.b16 %v789, %v787
          %v858 = vpack.c.b16 %v790, %v788
          %v859 = vpack.c.b16 %v793, %v791
          %v860 = vpack.c.b16 %v794, %v792
          %v861 = vpack.c.b16 %v797, %v795
          %v862 = vpack.c.b16 %v798, %v796
          %927 = vmatprep.subr.bf16.mxu0 %v814
          %928 = vmatpush1.bf16.msra.mxu0 %v813
          %929 = vmatprep.subr.bf16.mxu0 %v812
          %930 = vmatpush1.bf16.msra.mxu0 %v811
          %931 = vmatprep.subr.bf16.mxu0 %v810
          %932 = vmatpush1.bf16.msra.mxu0 %v809
          %933 = vmatprep.subr.bf16.mxu0 %v808
          %934 = vmatpush1.bf16.msra.mxu0 %v807
          %935 = vmatprep.subr.bf16.mxu0 %v806
          %936 = vmatpush1.bf16.msra.mxu0 %v805
          %937 = vmatprep.subr.bf16.mxu0 %v804
          %938 = vmatpush1.bf16.msra.mxu0 %v803
          %939 = vmatprep.subr.bf16.mxu0 %v802
          %940 = vmatpush1.bf16.msra.mxu0 %v801
          %941 = vmatprep.subr.bf16.mxu0 %v800
          %942 = vmatpush1.bf16.msra.mxu0 %v799
          %943 = vmatprep.subr.bf16.mxu0 %v830
          %944 = vmatpush2.bf16.msra.mxu0 %v829
          %945 = vmatprep.subr.bf16.mxu0 %v828
          %946 = vmatpush2.bf16.msra.mxu0 %v827
          %947 = vmatprep.subr.bf16.mxu0 %v826
          %948 = vmatpush2.bf16.msra.mxu0 %v825
          %949 = vmatprep.subr.bf16.mxu0 %v824
          %950 = vmatpush2.bf16.msra.mxu0 %v823
          %951 = vmatprep.subr.bf16.mxu0 %v822
          %952 = vmatpush2.bf16.msra.mxu0 %v821
          %953 = vmatprep.subr.bf16.mxu0 %v820
          %954 = vmatpush2.bf16.msra.mxu0 %v819
          %955 = vmatprep.subr.bf16.mxu0 %v818
          %956 = vmatpush2.bf16.msra.mxu0 %v817
          %957 = vmatprep.subr.bf16.mxu0 %v816
          %958 = vmatpush2.bf16.msra.mxu0 %v815
          %959 = vmatprep.mubr.bf16.mxu0 %v544
          %960 = vmatmul.mubr.bf16.gmra.mxu0 %v543
          %v961 = vpop.f32.mrf.mxu0
          %v962 = vadd.f32 0.0, %v961
          %v963 = vpop.f32.mrf.mxu0
          %v964 = vadd.f32 0.0, %v963
          %v965 = vpop.f32.mrf.mxu0
          %v966 = vadd.f32 0.0, %v965
          %v967 = vpop.f32.mrf.mxu0
          %v968 = vadd.f32 0.0, %v967
          %969 = vmatprep.mubr.bf16.mxu0 %v548
          %970 = vmatmul.mubr.bf16.gmra.mxu0 %v547
          %v971 = vpop.f32.mrf.mxu0
          %v972 = vadd.f32 0.0, %v971
          %v973 = vpop.f32.mrf.mxu0
          %v974 = vadd.f32 0.0, %v973
          %v975 = vpop.f32.mrf.mxu0
          %v976 = vadd.f32 0.0, %v975
          %v977 = vpop.f32.mrf.mxu0
          %v978 = vadd.f32 0.0, %v977
          %979 = vmatprep.mubr.bf16.mxu0 %v552
          %980 = vmatmul.mubr.bf16.gmra.mxu0 %v551
          %v981 = vpop.f32.mrf.mxu0
          %v982 = vadd.f32 0.0, %v981
          %v983 = vpop.f32.mrf.mxu0
          %v984 = vadd.f32 0.0, %v983
          %v985 = vpop.f32.mrf.mxu0
          %v986 = vadd.f32 0.0, %v985
          %v987 = vpop.f32.mrf.mxu0
          %v988 = vadd.f32 0.0, %v987
          %989 = vmatprep.mubr.bf16.mxu0 %v556
          %990 = vmatmul.mubr.bf16.gmra.mxu0 %v555
          %v991 = vpop.f32.mrf.mxu0
          %v992 = vadd.f32 0.0, %v991
          %v993 = vpop.f32.mrf.mxu0
          %v994 = vadd.f32 0.0, %v993
          %v995 = vpop.f32.mrf.mxu0
          %v996 = vadd.f32 0.0, %v995
          %v997 = vpop.f32.mrf.mxu0
          %v998 = vadd.f32 0.0, %v997
          %999 = vmatprep.mubr.bf16.mxu0 %v560
          %1000 = vmatmul.mubr.bf16.gmra.mxu0 %v559
          %v1001 = vpop.f32.mrf.mxu0
          %v1002 = vadd.f32 0.0, %v1001
          %v1003 = vpop.f32.mrf.mxu0
          %v1004 = vadd.f32 0.0, %v1003
          %v1005 = vpop.f32.mrf.mxu0
          %v1006 = vadd.f32 0.0, %v1005
          %v1007 = vpop.f32.mrf.mxu0
          %v1008 = vadd.f32 0.0, %v1007
          %1009 = vmatprep.mubr.bf16.mxu0 %v564
          %1010 = vmatmul.mubr.bf16.gmra.mxu0 %v563
          %v1011 = vpop.f32.mrf.mxu0
          %v1012 = vadd.f32 0.0, %v1011
          %v1013 = vpop.f32.mrf.mxu0
          %v1014 = vadd.f32 0.0, %v1013
          %v1015 = vpop.f32.mrf.mxu0
          %v1016 = vadd.f32 0.0, %v1015
          %v1017 = vpop.f32.mrf.mxu0
          %v1018 = vadd.f32 0.0, %v1017
          %1019 = vmatprep.mubr.bf16.mxu0 %v568
          %1020 = vmatmul.mubr.bf16.gmra.mxu0 %v567
          %v1021 = vpop.f32.mrf.mxu0
          %v1022 = vadd.f32 0.0, %v1021
          %v1023 = vpop.f32.mrf.mxu0
          %v1024 = vadd.f32 0.0, %v1023
          %v1025 = vpop.f32.mrf.mxu0
          %v1026 = vadd.f32 0.0, %v1025
          %v1027 = vpop.f32.mrf.mxu0
          %v1028 = vadd.f32 0.0, %v1027
          %1029 = vmatprep.mubr.bf16.mxu0 %v572
          %1030 = vmatmul.mubr.bf16.gmra.mxu0 %v571
          %v1031 = vpop.f32.mrf.mxu0
          %v1032 = vadd.f32 0.0, %v1031
          %v1033 = vpop.f32.mrf.mxu0
          %v1034 = vadd.f32 0.0, %v1033
          %v1035 = vpop.f32.mrf.mxu0
          %v1036 = vadd.f32 0.0, %v1035
          %v1037 = vpop.f32.mrf.mxu0
          %v1038 = vadd.f32 0.0, %v1037
          %1039 = vdwg.mxu0
          %1040 = vmatprep.subr.bf16.mxu0 %v846
          %1041 = vmatpush1.bf16.msra.mxu0 %v845
          %1042 = vmatprep.subr.bf16.mxu0 %v844
          %1043 = vmatpush1.bf16.msra.mxu0 %v843
          %1044 = vmatprep.subr.bf16.mxu0 %v842
          %1045 = vmatpush1.bf16.msra.mxu0 %v841
          %1046 = vmatprep.subr.bf16.mxu0 %v840
          %1047 = vmatpush1.bf16.msra.mxu0 %v839
          %1048 = vmatprep.subr.bf16.mxu0 %v838
          %1049 = vmatpush1.bf16.msra.mxu0 %v837
          %1050 = vmatprep.subr.bf16.mxu0 %v836
          %1051 = vmatpush1.bf16.msra.mxu0 %v835
          %1052 = vmatprep.subr.bf16.mxu0 %v834
          %1053 = vmatpush1.bf16.msra.mxu0 %v833
          %1054 = vmatprep.subr.bf16.mxu0 %v832
          %1055 = vmatpush1.bf16.msra.mxu0 %v831
          %1056 = vmatprep.subr.bf16.mxu0 %v862
          %1057 = vmatpush2.bf16.msra.mxu0 %v861
          %1058 = vmatprep.subr.bf16.mxu0 %v860
          %1059 = vmatpush2.bf16.msra.mxu0 %v859
          %1060 = vmatprep.subr.bf16.mxu0 %v858
          %1061 = vmatpush2.bf16.msra.mxu0 %v857
          %1062 = vmatprep.subr.bf16.mxu0 %v856
          %1063 = vmatpush2.bf16.msra.mxu0 %v855
          %1064 = vmatprep.subr.bf16.mxu0 %v854
          %1065 = vmatpush2.bf16.msra.mxu0 %v853
          %1066 = vmatprep.subr.bf16.mxu0 %v852
          %1067 = vmatpush2.bf16.msra.mxu0 %v851
          %1068 = vmatprep.subr.bf16.mxu0 %v850
          %1069 = vmatpush2.bf16.msra.mxu0 %v849
          %1070 = vmatprep.subr.bf16.mxu0 %v848
          %1071 = vmatpush2.bf16.msra.mxu0 %v847
          %1072 = vmatprep.mubr.bf16.mxu0 %v546
          %1073 = vmatmul.mubr.bf16.gmra.mxu0 %v545
          %v1074 = vpop.f32.mrf.mxu0
          %v1075 = vadd.f32 %v962, %v1074
          %v1076 = vpop.f32.mrf.mxu0
          %v1077 = vadd.f32 %v964, %v1076
          %v1078 = vpop.f32.mrf.mxu0
          %v1079 = vadd.f32 %v966, %v1078
          %v1080 = vpop.f32.mrf.mxu0
          %v1081 = vadd.f32 %v968, %v1080
          %1082 = vmatprep.mubr.bf16.mxu0 %v550
          %1083 = vmatmul.mubr.bf16.gmra.mxu0 %v549
          %v1084 = vpop.f32.mrf.mxu0
          %v1085 = vadd.f32 %v972, %v1084
          %v1086 = vpop.f32.mrf.mxu0
          %v1087 = vadd.f32 %v974, %v1086
          %v1088 = vpop.f32.mrf.mxu0
          %v1089 = vadd.f32 %v976, %v1088
          %v1090 = vpop.f32.mrf.mxu0
          %v1091 = vadd.f32 %v978, %v1090
          %1092 = vmatprep.mubr.bf16.mxu0 %v554
          %1093 = vmatmul.mubr.bf16.gmra.mxu0 %v553
          %v1094 = vpop.f32.mrf.mxu0
          %v1095 = vadd.f32 %v982, %v1094
          %v1096 = vpop.f32.mrf.mxu0
          %v1097 = vadd.f32 %v984, %v1096
          %v1098 = vpop.f32.mrf.mxu0
          %v1099 = vadd.f32 %v986, %v1098
          %v1100 = vpop.f32.mrf.mxu0
          %v1101 = vadd.f32 %v988, %v1100
          %1102 = vmatprep.mubr.bf16.mxu0 %v558
          %1103 = vmatmul.mubr.bf16.gmra.mxu0 %v557
          %v1104 = vpop.f32.mrf.mxu0
          %v1105 = vadd.f32 %v992, %v1104
          %v1106 = vpop.f32.mrf.mxu0
          %v1107 = vadd.f32 %v994, %v1106
          %v1108 = vpop.f32.mrf.mxu0
          %v1109 = vadd.f32 %v996, %v1108
          %v1110 = vpop.f32.mrf.mxu0
          %v1111 = vadd.f32 %v998, %v1110
          %1112 = vmatprep.mubr.bf16.mxu0 %v562
          %1113 = vmatmul.mubr.bf16.gmra.mxu0 %v561
          %v1114 = vpop.f32.mrf.mxu0
          %v1115 = vadd.f32 %v1002, %v1114
          %v1116 = vpop.f32.mrf.mxu0
          %v1117 = vadd.f32 %v1004, %v1116
          %v1118 = vpop.f32.mrf.mxu0
          %v1119 = vadd.f32 %v1006, %v1118
          %v1120 = vpop.f32.mrf.mxu0
          %v1121 = vadd.f32 %v1008, %v1120
          %1122 = vmatprep.mubr.bf16.mxu0 %v566
          %1123 = vmatmul.mubr.bf16.gmra.mxu0 %v565
          %v1124 = vpop.f32.mrf.mxu0
          %v1125 = vadd.f32 %v1012, %v1124
          %v1126 = vpop.f32.mrf.mxu0
          %v1127 = vadd.f32 %v1014, %v1126
          %v1128 = vpop.f32.mrf.mxu0
          %v1129 = vadd.f32 %v1016, %v1128
          %v1130 = vpop.f32.mrf.mxu0
          %v1131 = vadd.f32 %v1018, %v1130
          %1132 = vmatprep.mubr.bf16.mxu0 %v570
          %1133 = vmatmul.mubr.bf16.gmra.mxu0 %v569
          %v1134 = vpop.f32.mrf.mxu0
          %v1135 = vadd.f32 %v1022, %v1134
          %v1136 = vpop.f32.mrf.mxu0
          %v1137 = vadd.f32 %v1024, %v1136
          %v1138 = vpop.f32.mrf.mxu0
          %v1139 = vadd.f32 %v1026, %v1138
          %v1140 = vpop.f32.mrf.mxu0
          %v1141 = vadd.f32 %v1028, %v1140
          %1142 = vmatprep.mubr.bf16.mxu0 %v574
          %1143 = vmatmul.mubr.bf16.gmra.mxu0 %v573
          %v1144 = vpop.f32.mrf.mxu0
          %v1145 = vadd.f32 %v1032, %v1144
          %v1146 = vpop.f32.mrf.mxu0
          %v1147 = vadd.f32 %v1034, %v1146
          %v1148 = vpop.f32.mrf.mxu0
          %v1149 = vadd.f32 %v1036, %v1148
          %v1150 = vpop.f32.mrf.mxu0
          %v1151 = vadd.f32 %v1038, %v1150
          %1152 = vdwg.mxu0
          %v1153 = vld [vmem:[%s343] sm:$0xff]
          %v1154 = vld [vmem:[%s343 + $0x8] sm:$0xff]
          %v1155 = vld [vmem:[%s343 + $0x10] sm:$0xff]
          %v1156 = vld [vmem:[%s343 + $0x18] sm:$0xff]
          %v1157 = vld [vmem:[%s343 + $0x20] sm:$0xff]
          %v1158 = vld [vmem:[%s343 + $0x28] sm:$0xff]
          %v1159 = vld [vmem:[%s343 + $0x30] sm:$0xff]
          %v1160 = vld [vmem:[%s343 + $0x38] sm:$0xff]
          %v1161 = vld [vmem:[%s343 + $0x40] sm:$0xff]
          %v1162 = vld [vmem:[%s343 + $0x48] sm:$0xff]
          %v1163 = vld [vmem:[%s343 + $0x50] sm:$0xff]
          %v1164 = vld [vmem:[%s343 + $0x58] sm:$0xff]
          %v1165 = vld [vmem:[%s343 + $0x60] sm:$0xff]
          %v1166 = vld [vmem:[%s343 + $0x68] sm:$0xff]
          %v1167 = vld [vmem:[%s343 + $0x70] sm:$0xff]
          %v1168 = vld [vmem:[%s343 + $0x78] sm:$0xff]
          %v1169 = vld [vmem:[%s2] sm:$0xff]
          %v1170 = vld [vmem:[%s2 + $0x8] sm:$0xff]
          %vm1171 = vcmask 64512
          %v1173 = vsel %vm1171, %v1153, 0
          %v1176 = vsel %vm1171, %v1154, 0
          %v1179 = vsel %vm1171, %v1155, 0
          %v1182 = vsel %vm1171, %v1156, 0
          %v1185 = vsel %vm1171, %v1157, 0
          %v1188 = vsel %vm1171, %v1158, 0
          %v1191 = vsel %vm1171, %v1159, 0
          %v1194 = vsel %vm1171, %v1160, 0
          %v1197 = vsel %vm1171, %v1161, 0
          %v1200 = vsel %vm1171, %v1162, 0
          %v1203 = vsel %vm1171, %v1163, 0
          %v1206 = vsel %vm1171, %v1164, 0
          %v1209 = vsel %vm1171, %v1165, 0
          %v1212 = vsel %vm1171, %v1166, 0
          %v1215 = vsel %vm1171, %v1167, 0
          %v1218 = vsel %vm1171, %v1168, 0
          %1220 = vmatprep.subr.mxu0 0.0
          %1221 = vmatpush1.msra.mxu0 0.0
          %1222 = vmatprep.subr.mxu0 0.0
          %1223 = vmatpush1.msra.mxu0 0.0
          %1224 = vmatprep.subr.mxu0 0.0
          %1225 = vmatpush1.msra.mxu0 0.0
          %1226 = vmatprep.subr.mxu0 0.0
          %1227 = vmatpush1.msra.mxu0 0.0
          %1228 = vmatprep.subr.mxu0 0.0
          %1229 = vmatpush1.msra.mxu0 0.0
          %1230 = vmatprep.subr.mxu0 0.0
          %1231 = vmatpush1.msra.mxu0 0.0
          %1232 = vmatprep.subr.mxu0 0.0
          %1233 = vmatpush1.msra.mxu0 0.0
          %1234 = vmatprep.subr.mxu0 0.0
          %1235 = vmatpush1.msra.mxu0 0.0
          %1236 = vmatprep.subr.mxu0 0.0
          %1237 = vmatpush1.msra.mxu0 0.0
          %1238 = vmatprep.subr.mxu0 0.0
          %1239 = vmatpush1.msra.mxu0 0.0
          %1240 = vmatprep.subr.mxu0 0.0
          %1241 = vmatpush1.msra.mxu0 0.0
          %1242 = vmatprep.subr.mxu0 0.0
          %1243 = vmatpush1.msra.mxu0 0.0
          %1244 = vmatprep.subr.mxu0 0.0
          %1245 = vmatpush1.msra.mxu0 0.0
          %1246 = vmatprep.subr.mxu0 0.0
          %1247 = vmatpush1.msra.mxu0 0.0
          %1248 = vmatprep.subr.mxu0 0.0
          %1249 = vmatpush1.msra.mxu0 0.0
          %1250 = vmatprep.subr.mxu0 %v1170
          %1251 = vmatpush1.msra.mxu0 %v1169
          %1252 = vmatprep.subr.mxu0 0.0
          %1253 = vmatpush2.msra.mxu0 0.0
          %1254 = vmatprep.subr.mxu0 0.0
          %1255 = vmatpush2.msra.mxu0 0.0
          %1256 = vmatprep.subr.mxu0 0.0
          %1257 = vmatpush2.msra.mxu0 0.0
          %1258 = vmatprep.subr.mxu0 0.0
          %1259 = vmatpush2.msra.mxu0 0.0
          %1260 = vmatprep.subr.mxu0 0.0
          %1261 = vmatpush2.msra.mxu0 0.0
          %1262 = vmatprep.subr.mxu0 0.0
          %1263 = vmatpush2.msra.mxu0 0.0
          %1264 = vmatprep.subr.mxu0 0.0
          %1265 = vmatpush2.msra.mxu0 0.0
          %1266 = vmatprep.subr.mxu0 0.0
          %1267 = vmatpush2.msra.mxu0 0.0
          %1268 = vmatprep.subr.mxu0 0.0
          %1269 = vmatpush2.msra.mxu0 0.0
          %1270 = vmatprep.subr.mxu0 0.0
          %1271 = vmatpush2.msra.mxu0 0.0
          %1272 = vmatprep.subr.mxu0 0.0
          %1273 = vmatpush2.msra.mxu0 0.0
          %1274 = vmatprep.subr.mxu0 0.0
          %1275 = vmatpush2.msra.mxu0 0.0
          %1276 = vmatprep.subr.mxu0 0.0
          %1277 = vmatpush2.msra.mxu0 0.0
          %1278 = vmatprep.subr.mxu0 0.0
          %1279 = vmatpush2.msra.mxu0 0.0
          %1280 = vmatprep.subr.mxu0 0.0
          %1281 = vmatpush2.msra.mxu0 0.0
          %1282 = vmatprep.subr.mxu0 0.0
          %1283 = vmatpush2.msra.mxu0 0.0
          %1284 = vmatprep.mubr.f32.mxu0 0.0
          %1285 = vmatmul.mubr.f32.gmra.mxu0 %v1173
          %v1286 = vpop.f32.mrf.mxu0
          %v1287 = vadd.f32 0.0, %v1286
          %v1288 = vpop.f32.mrf.mxu0
          %v1289 = vadd.f32 0.0, %v1288
          %1290 = vmatprep.mubr.f32.mxu0 0.0
          %1291 = vmatmul.mubr.f32.gmra.mxu0 %v1176
          %v1292 = vpop.f32.mrf.mxu0
          %v1293 = vadd.f32 0.0, %v1292
          %v1294 = vpop.f32.mrf.mxu0
          %v1295 = vadd.f32 0.0, %v1294
          %1296 = vmatprep.mubr.f32.mxu0 0.0
          %1297 = vmatmul.mubr.f32.gmra.mxu0 %v1179
          %v1298 = vpop.f32.mrf.mxu0
          %v1299 = vadd.f32 0.0, %v1298
          %v1300 = vpop.f32.mrf.mxu0
          %v1301 = vadd.f32 0.0, %v1300
          %1302 = vmatprep.mubr.f32.mxu0 0.0
          %1303 = vmatmul.mubr.f32.gmra.mxu0 %v1182
          %v1304 = vpop.f32.mrf.mxu0
          %v1305 = vadd.f32 0.0, %v1304
          %v1306 = vpop.f32.mrf.mxu0
          %v1307 = vadd.f32 0.0, %v1306
          %1308 = vmatprep.mubr.f32.mxu0 0.0
          %1309 = vmatmul.mubr.f32.gmra.mxu0 %v1185
          %v1310 = vpop.f32.mrf.mxu0
          %v1311 = vadd.f32 0.0, %v1310
          %v1312 = vpop.f32.mrf.mxu0
          %v1313 = vadd.f32 0.0, %v1312
          %1314 = vmatprep.mubr.f32.mxu0 0.0
          %1315 = vmatmul.mubr.f32.gmra.mxu0 %v1188
          %v1316 = vpop.f32.mrf.mxu0
          %v1317 = vadd.f32 0.0, %v1316
          %v1318 = vpop.f32.mrf.mxu0
          %v1319 = vadd.f32 0.0, %v1318
          %1320 = vmatprep.mubr.f32.mxu0 0.0
          %1321 = vmatmul.mubr.f32.gmra.mxu0 %v1191
          %v1322 = vpop.f32.mrf.mxu0
          %v1323 = vadd.f32 0.0, %v1322
          %v1324 = vpop.f32.mrf.mxu0
          %v1325 = vadd.f32 0.0, %v1324
          %1326 = vmatprep.mubr.f32.mxu0 0.0
          %1327 = vmatmul.mubr.f32.gmra.mxu0 %v1194
          %v1328 = vpop.f32.mrf.mxu0
          %v1329 = vadd.f32 0.0, %v1328
          %v1330 = vpop.f32.mrf.mxu0
          %v1331 = vadd.f32 0.0, %v1330
          %1332 = vmatprep.mubr.f32.mxu0 0.0
          %1333 = vmatmul.mubr.f32.gmra.mxu0 %v1197
          %v1334 = vpop.f32.mrf.mxu0
          %v1335 = vadd.f32 0.0, %v1334
          %v1336 = vpop.f32.mrf.mxu0
          %v1337 = vadd.f32 0.0, %v1336
          %1338 = vmatprep.mubr.f32.mxu0 0.0
          %1339 = vmatmul.mubr.f32.gmra.mxu0 %v1200
          %v1340 = vpop.f32.mrf.mxu0
          %v1341 = vadd.f32 0.0, %v1340
          %v1342 = vpop.f32.mrf.mxu0
          %v1343 = vadd.f32 0.0, %v1342
          %1344 = vmatprep.mubr.f32.mxu0 0.0
          %1345 = vmatmul.mubr.f32.gmra.mxu0 %v1203
          %v1346 = vpop.f32.mrf.mxu0
          %v1347 = vadd.f32 0.0, %v1346
          %v1348 = vpop.f32.mrf.mxu0
          %v1349 = vadd.f32 0.0, %v1348
          %1350 = vmatprep.mubr.f32.mxu0 0.0
          %1351 = vmatmul.mubr.f32.gmra.mxu0 %v1206
          %v1352 = vpop.f32.mrf.mxu0
          %v1353 = vadd.f32 0.0, %v1352
          %v1354 = vpop.f32.mrf.mxu0
          %v1355 = vadd.f32 0.0, %v1354
          %1356 = vmatprep.mubr.f32.mxu0 0.0
          %1357 = vmatmul.mubr.f32.gmra.mxu0 %v1209
          %v1358 = vpop.f32.mrf.mxu0
          %v1359 = vadd.f32 0.0, %v1358
          %v1360 = vpop.f32.mrf.mxu0
          %v1361 = vadd.f32 0.0, %v1360
          %1362 = vmatprep.mubr.f32.mxu0 0.0
          %1363 = vmatmul.mubr.f32.gmra.mxu0 %v1212
          %v1364 = vpop.f32.mrf.mxu0
          %v1365 = vadd.f32 0.0, %v1364
          %v1366 = vpop.f32.mrf.mxu0
          %v1367 = vadd.f32 0.0, %v1366
          %1368 = vmatprep.mubr.f32.mxu0 0.0
          %1369 = vmatmul.mubr.f32.gmra.mxu0 %v1215
          %v1370 = vpop.f32.mrf.mxu0
          %v1371 = vadd.f32 0.0, %v1370
          %v1372 = vpop.f32.mrf.mxu0
          %v1373 = vadd.f32 0.0, %v1372
          %1374 = vmatprep.mubr.f32.mxu0 0.0
          %1375 = vmatmul.mubr.f32.gmra.mxu0 %v1218
          %v1376 = vpop.f32.mrf.mxu0
          %v1377 = vadd.f32 0.0, %v1376
          %v1378 = vpop.f32.mrf.mxu0
          %v1379 = vadd.f32 0.0, %v1378
          %1380 = vdwg.mxu0
          %v1381 = vmul.f32 %v1075, %v1287
          %v1382 = vmul.f32 %v1077, %v1289
          %v1383 = vmul.f32 %v1079, %v1293
          %v1384 = vmul.f32 %v1081, %v1295
          %v1385 = vmul.f32 %v1085, %v1299
          %v1386 = vmul.f32 %v1087, %v1301
          %v1387 = vmul.f32 %v1089, %v1305
          %v1388 = vmul.f32 %v1091, %v1307
          %v1389 = vmul.f32 %v1095, %v1311
          %v1390 = vmul.f32 %v1097, %v1313
          %v1391 = vmul.f32 %v1099, %v1317
          %v1392 = vmul.f32 %v1101, %v1319
          %v1393 = vmul.f32 %v1105, %v1323
          %v1394 = vmul.f32 %v1107, %v1325
          %v1395 = vmul.f32 %v1109, %v1329
          %v1396 = vmul.f32 %v1111, %v1331
          %v1397 = vmul.f32 %v1115, %v1335
          %v1398 = vmul.f32 %v1117, %v1337
          %v1399 = vmul.f32 %v1119, %v1341
          %v1400 = vmul.f32 %v1121, %v1343
          %v1401 = vmul.f32 %v1125, %v1347
          %v1402 = vmul.f32 %v1127, %v1349
          %v1403 = vmul.f32 %v1129, %v1353
          %v1404 = vmul.f32 %v1131, %v1355
          %v1405 = vmul.f32 %v1135, %v1359
          %v1406 = vmul.f32 %v1137, %v1361
          %v1407 = vmul.f32 %v1139, %v1365
          %v1408 = vmul.f32 %v1141, %v1367
          %v1409 = vmul.f32 %v1145, %v1371
          %v1410 = vmul.f32 %v1147, %v1373
          %v1411 = vmul.f32 %v1149, %v1377
          %v1412 = vmul.f32 %v1151, %v1379
          %v1413 = vld [vmem:[%s4] sm:$0xff]
          %v1414 = vld [vmem:[%s4 + $0x8] sm:$0xff]
          %v1415 = vld [vmem:[%s4 + $0x10] sm:$0xff]
          %v1416 = vld [vmem:[%s4 + $0x18] sm:$0xff]
          %v1417 = vld [vmem:[%s4 + $0x20] sm:$0xff]
          %v1418 = vld [vmem:[%s4 + $0x28] sm:$0xff]
          %v1419 = vld [vmem:[%s4 + $0x30] sm:$0xff]
          %v1420 = vld [vmem:[%s4 + $0x38] sm:$0xff]
          %v1421 = vld [vmem:[%s4 + $0x40] sm:$0xff]
          %v1422 = vld [vmem:[%s4 + $0x48] sm:$0xff]
          %v1423 = vld [vmem:[%s4 + $0x50] sm:$0xff]
          %v1424 = vld [vmem:[%s4 + $0x58] sm:$0xff]
          %v1425 = vld [vmem:[%s4 + $0x60] sm:$0xff]
          %v1426 = vld [vmem:[%s4 + $0x68] sm:$0xff]
          %v1427 = vld [vmem:[%s4 + $0x70] sm:$0xff]
          %v1428 = vld [vmem:[%s4 + $0x78] sm:$0xff]
          %v1429 = vld [vmem:[%s4 + $0x80] sm:$0xff]
          %v1430 = vld [vmem:[%s4 + $0x88] sm:$0xff]
          %v1431 = vld [vmem:[%s4 + $0x90] sm:$0xff]
          %v1432 = vld [vmem:[%s4 + $0x98] sm:$0xff]
          %v1433 = vld [vmem:[%s4 + $0xa0] sm:$0xff]
          %v1434 = vld [vmem:[%s4 + $0xa8] sm:$0xff]
          %v1435 = vld [vmem:[%s4 + $0xb0] sm:$0xff]
          %v1436 = vld [vmem:[%s4 + $0xb8] sm:$0xff]
          %v1437 = vld [vmem:[%s4 + $0xc0] sm:$0xff]
          %v1438 = vld [vmem:[%s4 + $0xc8] sm:$0xff]
          %v1439 = vld [vmem:[%s4 + $0xd0] sm:$0xff]
          %v1440 = vld [vmem:[%s4 + $0xd8] sm:$0xff]
          %v1441 = vld [vmem:[%s4 + $0xe0] sm:$0xff]
          %v1442 = vld [vmem:[%s4 + $0xe8] sm:$0xff]
          %v1443 = vld [vmem:[%s4 + $0xf0] sm:$0xff]
          %v1444 = vld [vmem:[%s4 + $0xf8] sm:$0xff]
          %1445 = vmatprep.subr.mxu0 0.0
          %1446 = vmatpush1.msra.mxu0 %v1428
          %1447 = vmatprep.subr.mxu0 0.0
          %1448 = vmatpush1.msra.mxu0 %v1427
          %1449 = vmatprep.subr.mxu0 0.0
          %1450 = vmatpush1.msra.mxu0 %v1426
          %1451 = vmatprep.subr.mxu0 0.0
          %1452 = vmatpush1.msra.mxu0 %v1425
          %1453 = vmatprep.subr.mxu0 0.0
          %1454 = vmatpush1.msra.mxu0 %v1424
          %1455 = vmatprep.subr.mxu0 0.0
          %1456 = vmatpush1.msra.mxu0 %v1423
          %1457 = vmatprep.subr.mxu0 0.0
          %1458 = vmatpush1.msra.mxu0 %v1422
          %1459 = vmatprep.subr.mxu0 0.0
          %1460 = vmatpush1.msra.mxu0 %v1421
          %1461 = vmatprep.subr.mxu0 0.0
          %1462 = vmatpush1.msra.mxu0 %v1420
          %1463 = vmatprep.subr.mxu0 0.0
          %1464 = vmatpush1.msra.mxu0 %v1419
          %1465 = vmatprep.subr.mxu0 0.0
          %1466 = vmatpush1.msra.mxu0 %v1418
          %1467 = vmatprep.subr.mxu0 0.0
          %1468 = vmatpush1.msra.mxu0 %v1417
          %1469 = vmatprep.subr.mxu0 0.0
          %1470 = vmatpush1.msra.mxu0 %v1416
          %1471 = vmatprep.subr.mxu0 0.0
          %1472 = vmatpush1.msra.mxu0 %v1415
          %1473 = vmatprep.subr.mxu0 0.0
          %1474 = vmatpush1.msra.mxu0 %v1414
          %1475 = vmatprep.subr.mxu0 0.0
          %1476 = vmatpush1.msra.mxu0 %v1413
          %1477 = vmatprep.subr.mxu0 0.0
          %1478 = vmatpush2.msra.mxu0 %v1444
          %1479 = vmatprep.subr.mxu0 0.0
          %1480 = vmatpush2.msra.mxu0 %v1443
          %1481 = vmatprep.subr.mxu0 0.0
          %1482 = vmatpush2.msra.mxu0 %v1442
          %1483 = vmatprep.subr.mxu0 0.0
          %1484 = vmatpush2.msra.mxu0 %v1441
          %1485 = vmatprep.subr.mxu0 0.0
          %1486 = vmatpush2.msra.mxu0 %v1440
          %1487 = vmatprep.subr.mxu0 0.0
          %1488 = vmatpush2.msra.mxu0 %v1439
          %1489 = vmatprep.subr.mxu0 0.0
          %1490 = vmatpush2.msra.mxu0 %v1438
          %1491 = vmatprep.subr.mxu0 0.0
          %1492 = vmatpush2.msra.mxu0 %v1437
          %1493 = vmatprep.subr.mxu0 0.0
          %1494 = vmatpush2.msra.mxu0 %v1436
          %1495 = vmatprep.subr.mxu0 0.0
          %1496 = vmatpush2.msra.mxu0 %v1435
          %1497 = vmatprep.subr.mxu0 0.0
          %1498 = vmatpush2.msra.mxu0 %v1434
          %1499 = vmatprep.subr.mxu0 0.0
          %1500 = vmatpush2.msra.mxu0 %v1433
          %1501 = vmatprep.subr.mxu0 0.0
          %1502 = vmatpush2.msra.mxu0 %v1432
          %1503 = vmatprep.subr.mxu0 0.0
          %1504 = vmatpush2.msra.mxu0 %v1431
          %1505 = vmatprep.subr.mxu0 0.0
          %1506 = vmatpush2.msra.mxu0 %v1430
          %1507 = vmatprep.subr.mxu0 0.0
          %1508 = vmatpush2.msra.mxu0 %v1429
          %1509 = vmatprep.mubr.f32.mxu0 %v1382
          %1510 = vmatmul.mubr.f32.gmra.mxu0 %v1381
          %v1511 = vpop.f32.mrf.mxu0
          %v1512 = vadd.f32 0.0, %v1511
          %v1513 = vpop.f32.mrf.mxu0
          %1514 = vmatprep.mubr.f32.mxu0 %v1384
          %1515 = vmatmul.mubr.f32.gmra.mxu0 %v1383
          %v1516 = vpop.f32.mrf.mxu0
          %v1517 = vadd.f32 0.0, %v1516
          %v1518 = vpop.f32.mrf.mxu0
          %1519 = vmatprep.mubr.f32.mxu0 %v1386
          %1520 = vmatmul.mubr.f32.gmra.mxu0 %v1385
          %v1521 = vpop.f32.mrf.mxu0
          %v1522 = vadd.f32 0.0, %v1521
          %v1523 = vpop.f32.mrf.mxu0
          %1524 = vmatprep.mubr.f32.mxu0 %v1388
          %1525 = vmatmul.mubr.f32.gmra.mxu0 %v1387
          %v1526 = vpop.f32.mrf.mxu0
          %v1527 = vadd.f32 0.0, %v1526
          %v1528 = vpop.f32.mrf.mxu0
          %1529 = vmatprep.mubr.f32.mxu0 %v1390
          %1530 = vmatmul.mubr.f32.gmra.mxu0 %v1389
          %v1531 = vpop.f32.mrf.mxu0
          %v1532 = vadd.f32 0.0, %v1531
          %v1533 = vpop.f32.mrf.mxu0
          %1534 = vmatprep.mubr.f32.mxu0 %v1392
          %1535 = vmatmul.mubr.f32.gmra.mxu0 %v1391
          %v1536 = vpop.f32.mrf.mxu0
          %v1537 = vadd.f32 0.0, %v1536
          %v1538 = vpop.f32.mrf.mxu0
          %1539 = vmatprep.mubr.f32.mxu0 %v1394
          %1540 = vmatmul.mubr.f32.gmra.mxu0 %v1393
          %v1541 = vpop.f32.mrf.mxu0
          %v1542 = vadd.f32 0.0, %v1541
          %v1543 = vpop.f32.mrf.mxu0
          %1544 = vmatprep.mubr.f32.mxu0 %v1396
          %1545 = vmatmul.mubr.f32.gmra.mxu0 %v1395
          %v1546 = vpop.f32.mrf.mxu0
          %v1547 = vadd.f32 0.0, %v1546
          %v1548 = vpop.f32.mrf.mxu0
          %1549 = vmatprep.mubr.f32.mxu0 %v1398
          %1550 = vmatmul.mubr.f32.gmra.mxu0 %v1397
          %v1551 = vpop.f32.mrf.mxu0
          %v1552 = vadd.f32 0.0, %v1551
          %v1553 = vpop.f32.mrf.mxu0
          %1554 = vmatprep.mubr.f32.mxu0 %v1400
          %1555 = vmatmul.mubr.f32.gmra.mxu0 %v1399
          %v1556 = vpop.f32.mrf.mxu0
          %v1557 = vadd.f32 0.0, %v1556
          %v1558 = vpop.f32.mrf.mxu0
          %1559 = vmatprep.mubr.f32.mxu0 %v1402
          %1560 = vmatmul.mubr.f32.gmra.mxu0 %v1401
          %v1561 = vpop.f32.mrf.mxu0
          %v1562 = vadd.f32 0.0, %v1561
          %v1563 = vpop.f32.mrf.mxu0
          %1564 = vmatprep.mubr.f32.mxu0 %v1404
          %1565 = vmatmul.mubr.f32.gmra.mxu0 %v1403
          %v1566 = vpop.f32.mrf.mxu0
          %v1567 = vadd.f32 0.0, %v1566
          %v1568 = vpop.f32.mrf.mxu0
          %1569 = vmatprep.mubr.f32.mxu0 %v1406
          %1570 = vmatmul.mubr.f32.gmra.mxu0 %v1405
          %v1571 = vpop.f32.mrf.mxu0
          %v1572 = vadd.f32 0.0, %v1571
          %v1573 = vpop.f32.mrf.mxu0
          %1574 = vmatprep.mubr.f32.mxu0 %v1408
          %1575 = vmatmul.mubr.f32.gmra.mxu0 %v1407
          %v1576 = vpop.f32.mrf.mxu0
          %v1577 = vadd.f32 0.0, %v1576
          %v1578 = vpop.f32.mrf.mxu0
          %1579 = vmatprep.mubr.f32.mxu0 %v1410
          %1580 = vmatmul.mubr.f32.gmra.mxu0 %v1409
          %v1581 = vpop.f32.mrf.mxu0
          %v1582 = vadd.f32 0.0, %v1581
          %v1583 = vpop.f32.mrf.mxu0
          %1584 = vmatprep.mubr.f32.mxu0 %v1412
          %1585 = vmatmul.mubr.f32.gmra.mxu0 %v1411
          %v1586 = vpop.f32.mrf.mxu0
          %v1587 = vadd.f32 0.0, %v1586
          %v1588 = vpop.f32.mrf.mxu0
          %1589 = vdwg.mxu0
          %v1590 = vpack.c.bf16 %v1517, %v1512
          %v1591 = vpack.c.bf16 %v1527, %v1522
          %v1592 = vpack.c.bf16 %v1537, %v1532
          %v1593 = vpack.c.bf16 %v1547, %v1542
          %v1594 = vpack.c.bf16 %v1557, %v1552
          %v1595 = vpack.c.bf16 %v1567, %v1562
          %v1596 = vpack.c.bf16 %v1577, %v1572
          %v1597 = vpack.c.bf16 %v1587, %v1582
          %v1606 = vunpack.c.l.b16 %v1590
          %v1607 = vunpack.c.h.b16 %v1590
          %v1608 = vunpack.c.l.b16 %v1591
          %v1609 = vunpack.c.h.b16 %v1591
          %v1610 = vunpack.c.l.b16 %v1592
          %v1611 = vunpack.c.h.b16 %v1592
          %v1612 = vunpack.c.l.b16 %v1593
          %v1613 = vunpack.c.h.b16 %v1593
          %v1614 = vunpack.c.l.b16 %v1594
          %v1615 = vunpack.c.h.b16 %v1594
          %v1616 = vunpack.c.l.b16 %v1595
          %v1617 = vunpack.c.h.b16 %v1595
          %v1618 = vunpack.c.l.b16 %v1596
          %v1619 = vunpack.c.h.b16 %v1596
          %v1620 = vunpack.c.l.b16 %v1597
          %v1621 = vunpack.c.h.b16 %v1597
          %v1622 = vpack.c.b16 %v1606, %v1606
          %v1623 = vpack.c.b16 %v1607, %v1607
          %v1624 = vpack.c.b16 %v1608, %v1608
          %v1625 = vpack.c.b16 %v1609, %v1609
          %v1626 = vpack.c.b16 %v1610, %v1610
          %v1627 = vpack.c.b16 %v1611, %v1611
          %v1628 = vpack.c.b16 %v1612, %v1612
          %v1629 = vpack.c.b16 %v1613, %v1613
          %v1630 = vpack.c.b16 %v1614, %v1614
          %v1631 = vpack.c.b16 %v1615, %v1615
          %v1632 = vpack.c.b16 %v1616, %v1616
          %v1633 = vpack.c.b16 %v1617, %v1617
          %v1634 = vpack.c.b16 %v1618, %v1618
          %v1635 = vpack.c.b16 %v1619, %v1619
          %v1636 = vpack.c.b16 %v1620, %v1620
          %v1637 = vpack.c.b16 %v1621, %v1621
          %vm1654 = vcmask 257024
          %1655 = vst.msk [vmem:[#allocation2] sm:$0xf] %vm1654, %v1622
          %1656 = vst.msk [vmem:[#allocation2 + $0x4] sm:$0xf] %vm1654, %v1623
          %1657 = vst.msk [vmem:[#allocation2 + $0x8] sm:$0xf] %vm1654, %v1624
          %1658 = vst.msk [vmem:[#allocation2 + $0xc] sm:$0xf] %vm1654, %v1625
          %1659 = vst.msk [vmem:[#allocation2 + $0x10] sm:$0xf] %vm1654, %v1626
          %1660 = vst.msk [vmem:[#allocation2 + $0x14] sm:$0xf] %vm1654, %v1627
          %1661 = vst.msk [vmem:[#allocation2 + $0x18] sm:$0xf] %vm1654, %v1628
          %1662 = vst.msk [vmem:[#allocation2 + $0x1c] sm:$0xf] %vm1654, %v1629
          %1663 = vst.msk [vmem:[#allocation2 + $0x20] sm:$0xf] %vm1654, %v1630
          %1664 = vst.msk [vmem:[#allocation2 + $0x24] sm:$0xf] %vm1654, %v1631
          %1665 = vst.msk [vmem:[#allocation2 + $0x28] sm:$0xf] %vm1654, %v1632
          %1666 = vst.msk [vmem:[#allocation2 + $0x2c] sm:$0xf] %vm1654, %v1633
          %1667 = vst.msk [vmem:[#allocation2 + $0x30] sm:$0xf] %vm1654, %v1634
          %1668 = vst.msk [vmem:[#allocation2 + $0x34] sm:$0xf] %vm1654, %v1635
          %1669 = vst.msk [vmem:[#allocation2 + $0x38] sm:$0xf] %vm1654, %v1636
          %1670 = vst.msk [vmem:[#allocation2 + $0x3c] sm:$0xf] %vm1654, %v1637
        $region56: #{tpu_custom_call.1} parent=43 // pred_fallthru
          _
        %v1671 = vld [vmem:[#allocation2] sm:$0xf]
        %v1672 = vld [vmem:[#allocation2 + $0x4] sm:$0xf]
        %v1673 = vld [vmem:[#allocation2 + $0x8] sm:$0xf]
        %v1674 = vld [vmem:[#allocation2 + $0xc] sm:$0xf]
        %v1675 = vld [vmem:[#allocation2 + $0x10] sm:$0xf]
        %v1676 = vld [vmem:[#allocation2 + $0x14] sm:$0xf]
        %v1677 = vld [vmem:[#allocation2 + $0x18] sm:$0xf]
        %v1678 = vld [vmem:[#allocation2 + $0x1c] sm:$0xf]
        %v1679 = vld [vmem:[#allocation2 + $0x20] sm:$0xf]
        %v1680 = vld [vmem:[#allocation2 + $0x24] sm:$0xf]
        %v1681 = vld [vmem:[#allocation2 + $0x28] sm:$0xf]
        %v1682 = vld [vmem:[#allocation2 + $0x2c] sm:$0xf]
        %v1683 = vld [vmem:[#allocation2 + $0x30] sm:$0xf]
        %v1684 = vld [vmem:[#allocation2 + $0x34] sm:$0xf]
        %v1685 = vld [vmem:[#allocation2 + $0x38] sm:$0xf]
        %v1686 = vld [vmem:[#allocation2 + $0x3c] sm:$0xf]
        %v1687 = vld [vmem:[%s292] sm:$0xf]
        %v1688 = vld [vmem:[%s292 + $0x4] sm:$0xf]
        %v1689 = vld [vmem:[%s292 + $0x8] sm:$0xf]
        %v1690 = vld [vmem:[%s292 + $0xc] sm:$0xf]
        %v1707 = vunpack.c.l.b16 %v1671
        %v1708 = vunpack.c.l.b16 %v1672
        %v1709 = vunpack.c.l.b16 %v1673
        %v1710 = vunpack.c.l.b16 %v1674
        %v1711 = vunpack.c.l.b16 %v1675
        %v1712 = vunpack.c.l.b16 %v1676
        %v1713 = vunpack.c.l.b16 %v1677
        %v1714 = vunpack.c.l.b16 %v1678
        %v1715 = vunpack.c.l.b16 %v1679
        %v1716 = vunpack.c.l.b16 %v1680
        %v1717 = vunpack.c.l.b16 %v1681
        %v1718 = vunpack.c.l.b16 %v1682
        %v1719 = vunpack.c.l.b16 %v1683
        %v1720 = vunpack.c.l.b16 %v1684
        %v1721 = vunpack.c.l.b16 %v1685
        %v1722 = vunpack.c.l.b16 %v1686
        %v1723 = vpack.c.b16 %v1708, %v1707
        %v1724 = vpack.c.b16 %v1710, %v1709
        %v1725 = vpack.c.b16 %v1712, %v1711
        %v1726 = vpack.c.b16 %v1714, %v1713
        %v1727 = vpack.c.b16 %v1716, %v1715
        %v1728 = vpack.c.b16 %v1718, %v1717
        %v1729 = vpack.c.b16 %v1720, %v1719
        %v1730 = vpack.c.b16 %v1722, %v1721
        %v1735 = vunpack.c.l.b16 %v1687
        %v1736 = vunpack.c.l.b16 %v1688
        %v1737 = vunpack.c.l.b16 %v1689
        %v1738 = vunpack.c.l.b16 %v1690
        %v1739 = vpack.c.b16 %v1736, %v1735
        %v1740 = vpack.c.b16 %v1738, %v1737
        %vm1743 = vcmask 261120
        %v1745 = vsel %vm1743, %v1723, 0
        %v1748 = vsel %vm1743, %v1724, 0
        %v1751 = vsel %vm1743, %v1725, 0
        %v1754 = vsel %vm1743, %v1726, 0
        %v1757 = vsel %vm1743, %v1727, 0
        %v1760 = vsel %vm1743, %v1728, 0
        %v1763 = vsel %vm1743, %v1729, 0
        %v1766 = vsel %vm1743, %v1730, 0
        %1768 = vmatprep.subr.bf16.mxu0 0
        %1769 = vmatpush1.bf16.msra.mxu0 0
        %1770 = vmatprep.subr.bf16.mxu0 0
        %1771 = vmatpush1.bf16.msra.mxu0 0
        %1772 = vmatprep.subr.bf16.mxu0 0
        %1773 = vmatpush1.bf16.msra.mxu0 0
        %1774 = vmatprep.subr.bf16.mxu0 0
        %1775 = vmatpush1.bf16.msra.mxu0 0
        %1776 = vmatprep.subr.bf16.mxu0 0
        %1777 = vmatpush1.bf16.msra.mxu0 0
        %1778 = vmatprep.subr.bf16.mxu0 0
        %1779 = vmatpush1.bf16.msra.mxu0 0
        %1780 = vmatprep.subr.bf16.mxu0 0
        %1781 = vmatpush1.bf16.msra.mxu0 %v1740
        %1782 = vmatprep.subr.bf16.mxu0 0
        %1783 = vmatpush1.bf16.msra.mxu0 %v1739
        %1784 = vmatprep.subr.bf16.mxu0 0
        %1785 = vmatpush2.bf16.msra.mxu0 0
        %1786 = vmatprep.subr.bf16.mxu0 0
        %1787 = vmatpush2.bf16.msra.mxu0 0
        %1788 = vmatprep.subr.bf16.mxu0 0
        %1789 = vmatpush2.bf16.msra.mxu0 0
        %1790 = vmatprep.subr.bf16.mxu0 0
        %1791 = vmatpush2.bf16.msra.mxu0 0
        %1792 = vmatprep.subr.bf16.mxu0 0
        %1793 = vmatpush2.bf16.msra.mxu0 0
        %1794 = vmatprep.subr.bf16.mxu0 0
        %1795 = vmatpush2.bf16.msra.mxu0 0
        %1796 = vmatprep.subr.bf16.mxu0 0
        %1797 = vmatpush2.bf16.msra.mxu0 0
        %1798 = vmatprep.subr.bf16.mxu0 0
        %1799 = vmatpush2.bf16.msra.mxu0 0
        %1800 = vmatprep.mubr.bf16.mxu0 0
        %1801 = vmatmul.mubr.bf16.gmra.mxu0 %v1745
        %v1802 = vpop.f32.mrf.mxu0
        %v1803 = vadd.f32 0.0, %v1802
        %v1804 = vpop.f32.mrf.mxu0
        %v1805 = vpop.f32.mrf.mxu0
        %v1806 = vadd.f32 0.0, %v1805
        %v1807 = vpop.f32.mrf.mxu0
        %1808 = vmatprep.mubr.bf16.mxu0 0
        %1809 = vmatmul.mubr.bf16.gmra.mxu0 %v1748
        %v1810 = vpop.f32.mrf.mxu0
        %v1811 = vadd.f32 0.0, %v1810
        %v1812 = vpop.f32.mrf.mxu0
        %v1813 = vpop.f32.mrf.mxu0
        %v1814 = vadd.f32 0.0, %v1813
        %v1815 = vpop.f32.mrf.mxu0
        %1816 = vmatprep.mubr.bf16.mxu0 0
        %1817 = vmatmul.mubr.bf16.gmra.mxu0 %v1751
        %v1818 = vpop.f32.mrf.mxu0
        %v1819 = vadd.f32 0.0, %v1818
        %v1820 = vpop.f32.mrf.mxu0
        %v1821 = vpop.f32.mrf.mxu0
        %v1822 = vadd.f32 0.0, %v1821
        %v1823 = vpop.f32.mrf.mxu0
        %1824 = vmatprep.mubr.bf16.mxu0 0
        %1825 = vmatmul.mubr.bf16.gmra.mxu0 %v1754
        %v1826 = vpop.f32.mrf.mxu0
        %v1827 = vadd.f32 0.0, %v1826
        %v1828 = vpop.f32.mrf.mxu0
        %v1829 = vpop.f32.mrf.mxu0
        %v1830 = vadd.f32 0.0, %v1829
        %v1831 = vpop.f32.mrf.mxu0
        %1832 = vmatprep.mubr.bf16.mxu0 0
        %1833 = vmatmul.mubr.bf16.gmra.mxu0 %v1757
        %v1834 = vpop.f32.mrf.mxu0
        %v1835 = vadd.f32 0.0, %v1834
        %v1836 = vpop.f32.mrf.mxu0
        %v1837 = vpop.f32.mrf.mxu0
        %v1838 = vadd.f32 0.0, %v1837
        %v1839 = vpop.f32.mrf.mxu0
        %1840 = vmatprep.mubr.bf16.mxu0 0
        %1841 = vmatmul.mubr.bf16.gmra.mxu0 %v1760
        %v1842 = vpop.f32.mrf.mxu0
        %v1843 = vadd.f32 0.0, %v1842
        %v1844 = vpop.f32.mrf.mxu0
        %v1845 = vpop.f32.mrf.mxu0
        %v1846 = vadd.f32 0.0, %v1845
        %v1847 = vpop.f32.mrf.mxu0
        %1848 = vmatprep.mubr.bf16.mxu0 0
        %1849 = vmatmul.mubr.bf16.gmra.mxu0 %v1763
        %v1850 = vpop.f32.mrf.mxu0
        %v1851 = vadd.f32 0.0, %v1850
        %v1852 = vpop.f32.mrf.mxu0
        %v1853 = vpop.f32.mrf.mxu0
        %v1854 = vadd.f32 0.0, %v1853
        %v1855 = vpop.f32.mrf.mxu0
        %1856 = vmatprep.mubr.bf16.mxu0 0
        %1857 = vmatmul.mubr.bf16.gmra.mxu0 %v1766
        %v1858 = vpop.f32.mrf.mxu0
        %v1859 = vadd.f32 0.0, %v1858
        %v1860 = vpop.f32.mrf.mxu0
        %v1861 = vpop.f32.mrf.mxu0
        %v1862 = vadd.f32 0.0, %v1861
        %v1863 = vpop.f32.mrf.mxu0
        %1864 = vdwg.mxu0
        %v1865 = vsub.f32 0.0, %v1803
        %v1866 = vsub.f32 0.0, %v1806
        %v1867 = vsub.f32 0.0, %v1811
        %v1868 = vsub.f32 0.0, %v1814
        %v1869 = vsub.f32 0.0, %v1819
        %v1870 = vsub.f32 0.0, %v1822
        %v1871 = vsub.f32 0.0, %v1827
        %v1872 = vsub.f32 0.0, %v1830
        %v1873 = vsub.f32 0.0, %v1835
        %v1874 = vsub.f32 0.0, %v1838
        %v1875 = vsub.f32 0.0, %v1843
        %v1876 = vsub.f32 0.0, %v1846
        %v1877 = vsub.f32 0.0, %v1851
        %v1878 = vsub.f32 0.0, %v1854
        %v1879 = vsub.f32 0.0, %v1859
        %v1880 = vsub.f32 0.0, %v1862
        %v1881 = vmul.f32 %v1865, 1.442695
        %v1882 = vpow.pop %v1881
        %v1883 = vmul.f32 %v1866, 1.442695
        %v1884 = vpow.pop %v1883
        %v1885 = vmul.f32 %v1867, 1.442695
        %v1886 = vpow.pop %v1885
        %v1887 = vmul.f32 %v1868, 1.442695
        %v1888 = vpow.pop %v1887
        %v1889 = vmul.f32 %v1869, 1.442695
        %v1890 = vpow.pop %v1889
        %v1891 = vmul.f32 %v1870, 1.442695
        %v1892 = vpow.pop %v1891
        %v1893 = vmul.f32 %v1871, 1.442695
        %v1894 = vpow.pop %v1893
        %v1895 = vmul.f32 %v1872, 1.442695
        %v1896 = vpow.pop %v1895
        %v1897 = vmul.f32 %v1873, 1.442695
        %v1898 = vpow.pop %v1897
        %v1899 = vmul.f32 %v1874, 1.442695
        %v1900 = vpow.pop %v1899
        %v1901 = vmul.f32 %v1875, 1.442695
        %v1902 = vpow.pop %v1901
        %v1903 = vmul.f32 %v1876, 1.442695
        %v1904 = vpow.pop %v1903
        %v1905 = vmul.f32 %v1877, 1.442695
        %v1906 = vpow.pop %v1905
        %v1907 = vmul.f32 %v1878, 1.442695
        %v1908 = vpow.pop %v1907
        %v1909 = vmul.f32 %v1879, 1.442695
        %v1910 = vpow.pop %v1909
        %v1911 = vmul.f32 %v1880, 1.442695
        %v1912 = vpow.pop %v1911
        %v1913 = vadd.f32 %v1882, 1.0
        %v1914 = vadd.f32 %v1884, 1.0
        %v1915 = vadd.f32 %v1886, 1.0
        %v1916 = vadd.f32 %v1888, 1.0
        %v1917 = vadd.f32 %v1890, 1.0
        %v1918 = vadd.f32 %v1892, 1.0
        %v1919 = vadd.f32 %v1894, 1.0
        %v1920 = vadd.f32 %v1896, 1.0
        %v1921 = vadd.f32 %v1898, 1.0
        %v1922 = vadd.f32 %v1900, 1.0
        %v1923 = vadd.f32 %v1902, 1.0
        %v1924 = vadd.f32 %v1904, 1.0
        %v1925 = vadd.f32 %v1906, 1.0
        %v1926 = vadd.f32 %v1908, 1.0
        %v1927 = vadd.f32 %v1910, 1.0
        %v1928 = vadd.f32 %v1912, 1.0
        %v1929 = vrcp.pop %v1913
        %v1930 = vrcp.pop %v1914
        %v1931 = vrcp.pop %v1915
        %v1932 = vrcp.pop %v1916
        %v1933 = vrcp.pop %v1917
        %v1934 = vrcp.pop %v1918
        %v1935 = vrcp.pop %v1919
        %v1936 = vrcp.pop %v1920
        %v1937 = vrcp.pop %v1921
        %v1938 = vrcp.pop %v1922
        %v1939 = vrcp.pop %v1923
        %v1940 = vrcp.pop %v1924
        %v1941 = vrcp.pop %v1925
        %v1942 = vrcp.pop %v1926
        %v1943 = vrcp.pop %v1927
        %v1944 = vrcp.pop %v1928
        %1945 = vst [vmem:[%s331] sm:$0xff] %v1929
        %1946 = vst [vmem:[%s331 + $0x8] sm:$0xff] %v1930
        %1947 = vst [vmem:[%s331 + $0x10] sm:$0xff] %v1931
        %1948 = vst [vmem:[%s331 + $0x18] sm:$0xff] %v1932
        %1949 = vst [vmem:[%s331 + $0x20] sm:$0xff] %v1933
        %1950 = vst [vmem:[%s331 + $0x28] sm:$0xff] %v1934
        %1951 = vst [vmem:[%s331 + $0x30] sm:$0xff] %v1935
        %1952 = vst [vmem:[%s331 + $0x38] sm:$0xff] %v1936
        %1953 = vst [vmem:[%s331 + $0x40] sm:$0xff] %v1937
        %1954 = vst [vmem:[%s331 + $0x48] sm:$0xff] %v1938
        %1955 = vst [vmem:[%s331 + $0x50] sm:$0xff] %v1939
        %1956 = vst [vmem:[%s331 + $0x58] sm:$0xff] %v1940
        %1957 = vst [vmem:[%s331 + $0x60] sm:$0xff] %v1941
        %1958 = vst [vmem:[%s331 + $0x68] sm:$0xff] %v1942
        %1959 = vst [vmem:[%s331 + $0x70] sm:$0xff] %v1943
        %1960 = vst [vmem:[%s331 + $0x78] sm:$0xff] %v1944
        %s1961 = sand.u32 %s187, 1
        %s1962 = scalar_lea.sflag [#allocation5], %s1961
        %s1963 = sand.u32 %s187, 1
        %s1964 = smul.addr %s1963, 128
        %s1965 = scalar_lea.vmem [#allocation8], %s1964
        // Predicated region
        $region57: #{tpu_custom_call.1} parent=43 // pred_check
          %p1966 = pneg %p197
        $region58: #{tpu_custom_call.1} parent=43 // pred_check_branch
          %1968 = sbr.rel (%p1966) target = $region60
        $region59: #{tpu_custom_call.1} parent=43 // pred_region
          %s1969 = smul.u32 16, %s28
          %s1971 = ssub.s32 2048, 2048
          %1972 = vsyncadd %s1962, %s1971
          %s1973 = smul.addr %s1969, 2
          %s1974 = sadd.s32 %s29, %s1973
          %s1975 = smul.addr %s1974, 128
          %s1976 = scalar_lea.hbm %s6, %s1975
          %s1977 = sshll.u32 %s1965, 4
          %s1978 = int_to_ptr.vmem [resolvable:$true] %s1977
          %1983 = dma.vmem_to_hbm [thread:$0]  %s1978, 2048, %s1976, %s1962, 128, 256, 8
        $region60: #{tpu_custom_call.1} parent=43 // pred_fallthru
          _
      $region44: #{tpu_custom_call.1} parent=5 // pred_fallthru
        _
      %p1984 = scmp.le.s32.totalorder 2, %s19
      // Predicated region
      $region61: #{tpu_custom_call.1} parent=5 // pred_check
        %p1985 = pneg %p1984
      $region62: #{tpu_custom_call.1} parent=5 // pred_check_branch
        %1987 = sbr.rel (%p1985) target = $region64
      $region63: #{tpu_custom_call.1} parent=5 // pred_region
        %s1988 = ssub.s32 %s19, 2
        // Predicated region
        $region65: #{tpu_custom_call.1} parent=63 // pred_check
          %p1989 = pneg %p203
        $region66: #{tpu_custom_call.1} parent=63 // pred_check_branch
          %1991 = sbr.rel (%p1989) target = $region68
        $region67: #{tpu_custom_call.1} parent=63 // pred_region
          %s1992 = sand.u32 %s188, 1
          %s1993 = scalar_lea.sflag [#allocation5], %s1992
          %s1994 = sand.u32 %s188, 1
          %s1995 = smul.addr %s1994, 128
          %s1996 = scalar_lea.vmem [#allocation8], %s1995
          %1997 = dma.done %s1993, 2048
        $region68: #{tpu_custom_call.1} parent=63 // pred_fallthru
          _
      $region64: #{tpu_custom_call.1} parent=5 // pred_fallthru
        _
    $region6: #{tpu_custom_call.1} parent=1 // loop_footer
      %s23 = sadd.s32 1, %s19
    $region7: #{tpu_custom_call.1} parent=1 // loop_footer_branch
      %18 = sbr.rel target = $region3
    $region8: #{tpu_custom_call.1} parent=1 // loop_exit
      _
    %1998 = vsyncpa [#allocation4], 1
    %s1999 = scalar_lea.sflag [#allocation4], 1
    %2000 = vsyncpa %s1999, 1
    %2001 = vsyncpa [#allocation7], 1
    %s2002 = scalar_lea.sflag [#allocation7], 1
    %2003 = vsyncpa %s2002, 1
    %2004 = vsyncpa [#allocation5], 1
    %s2005 = scalar_lea.sflag [#allocation5], 1
    %2006 = vsyncpa %s2005, 1

</llo_original>
